<compile_context>
chip_gen: v5e
topology: v5e:2x2
jax: 0.10.0
libtpu: 0.0.40
codegen_flags: <defaults>
</compile_context>

<pallas_src>
import functools

import jax
import jax.numpy as jnp
from jax import lax
from jax.experimental import pallas as pl
from jax.experimental.pallas import tpu as pltpu


# ----------------------------------------------------------------------------
# Fused kernel: all (layer, direction) recurrences of encoder + decoder.
# Grid axis 0 iterates over the stacked layers (sequential -> "arbitrary").
# ----------------------------------------------------------------------------
def bdrnn_fused_kernel(x_ref, w_ref, b_ref, out_ref, pre_sc,
                       *, T, Bp, Hp, fuse_whh):
    # x_ref:   (T*Bp, Dp)    bf16  padded time-major input (row = t*Bp + b)
    # w_ref:   (1, 2*Dp, Dp) bf16  rows [0,Dp): Wih (fwd cols [0,Hp), bwd [Hp,Dp))
    #                              rows [Dp,2Dp): block-diagonal Whh (fwd / bwd)
    # b_ref:   (1, 1, Dp)    f32   combined bias (b_ih + b_hh), fwd/bwd packed
    # out_ref: (T*Bp, Dp)    f32   resident output == cross-layer activation carry
    # pre_sc:  (T*Bp, Dp)    f32   hoisted input projection x @ Wih + bias
    layer = pl.program_id(0)
    Dp = 2 * Hp

    wih = w_ref[0, pl.ds(0, Dp), :]          # (Dp, Dp) bf16
    bias = b_ref[0]                          # (1, Dp)  f32

    # Hoisted input projection: ONE big MXU matmul per layer for the whole
    # sequence; the serial per-step chain only does h @ Whh (+ tanh).
    @pl.when(layer == 0)
    def _():
        pre_sc[...] = (jnp.dot(x_ref[...], wih,
                               preferred_element_type=jnp.float32) + bias)

    @pl.when(layer != 0)
    def _():
        # out_ref holds the previous layer's activations (resident block).
        pre_sc[...] = (jnp.dot(out_ref[...].astype(jnp.bfloat16), wih,
                               preferred_element_type=jnp.float32) + bias)

    if fuse_whh:
        # v6e/v7x: one 256-wide block-diagonal recurrent matmul per step.
        whh = w_ref[0, pl.ds(Dp, Dp), :]     # (Dp, Dp) bf16, block-diagonal

        def step(t, h):
            rf = t * Bp
            rb = (T - 1 - t) * Bp            # backward direction walks in reverse
            if not isinstance(t, int):
                rf = pl.multiple_of(rf, Bp)
                rb = pl.multiple_of(rb, Bp)
            addend = jnp.concatenate(
                [pre_sc[pl.ds(rf, Bp), pl.ds(0, Hp)],
                 pre_sc[pl.ds(rb, Bp), pl.ds(Hp, Hp)]], axis=-1)
            h = jnp.tanh(jnp.dot(h.astype(jnp.bfloat16), whh,
                                 preferred_element_type=jnp.float32) + addend)
            # Aligned, lane-dense (Bp, Hp) = (8, 128) stores into the carry.
            out_ref[pl.ds(rf, Bp), pl.ds(0, Hp)] = h[:, :Hp]
            out_ref[pl.ds(rb, Bp), pl.ds(Hp, Hp)] = h[:, Hp:]
            return h

        carry0 = jnp.zeros((Bp, Dp), jnp.float32)
    else:
        # v5e (and unknown chips): two independent 128-wide matmuls per step.
        whh_f = w_ref[0, pl.ds(Dp, Hp), pl.ds(0, Hp)]          # (Hp, Hp)
        whh_b = w_ref[0, pl.ds(Dp + Hp, Hp), pl.ds(Hp, Hp)]    # (Hp, Hp)

        def step(t, carry):
            h_f, h_b = carry
            rf = t * Bp
            rb = (T - 1 - t) * Bp
            if not isinstance(t, int):
                rf = pl.multiple_of(rf, Bp)
                rb = pl.multiple_of(rb, Bp)
            h_f = jnp.tanh(jnp.dot(h_f.astype(jnp.bfloat16), whh_f,
                                   preferred_element_type=jnp.float32)
                           + pre_sc[pl.ds(rf, Bp), pl.ds(0, Hp)])
            h_b = jnp.tanh(jnp.dot(h_b.astype(jnp.bfloat16), whh_b,
                                   preferred_element_type=jnp.float32)
                           + pre_sc[pl.ds(rb, Bp), pl.ds(Hp, Hp)])
            out_ref[pl.ds(rf, Bp), pl.ds(0, Hp)] = h_f
            out_ref[pl.ds(rb, Bp), pl.ds(Hp, Hp)] = h_b
            return h_f, h_b

        carry0 = (jnp.zeros((Bp, Hp), jnp.float32),
                  jnp.zeros((Bp, Hp), jnp.float32))

    if T <= 16:
        # Tiny static T: full unroll gives the LLO scheduler maximum visibility.
        c = carry0
        for t in range(T):
            c = step(t, c)
    else:
        # Production T: bounded unroll keeps code size / vreg live ranges sane.
        lax.fori_loop(0, T, step, carry0, unroll=4)


# ----------------------------------------------------------------------------
# Wrapper: padding / packing (plain JAX, done once) + pallas_call.
# ----------------------------------------------------------------------------
def _round_up(x, m):
    return (x + m - 1) // m * m


def _prefer_fused_whh():
    """256-wide block-diag Whh only on chips with native 256-wide MXUs."""
    try:
        kind = jax.devices()[0].device_kind.lower()
    except Exception:
        return False
    return ("v6" in kind) or ("v7" in kind)


def pack_params(layers, input_size, Hp):
    """Pack every bidirectional layer into one (2*Dp, Dp) weight slab + bias."""
    Dp = 2 * Hp
    assert input_size <= Dp
    w_all, b_all = [], []
    prev_h = None
    for i, (fwd, bwd) in enumerate(layers):
        W = jnp.zeros((2 * Dp, Dp), jnp.float32)
        bias = jnp.zeros((1, Dp), jnp.float32)
        if i == 0:
            in_segs = [(0, input_size)]
        else:
            in_segs = [(0, prev_h), (Hp, prev_h)]   # fwd feats at 0.., bwd at Hp..
        for d, (wih_t, whh_t, b) in enumerate((fwd, bwd)):
            H = whh_t.shape[0]
            c0 = d * Hp
            src = 0
            for dst, width in in_segs:              # input weights -> rows [0, Dp)
                W = W.at[dst:dst + width, c0:c0 + H].set(wih_t[src:src + width])
                src += width
            # recurrent weights, block-diagonal -> rows [Dp, 2*Dp)
            W = W.at[Dp + c0:Dp + c0 + H, c0:c0 + H].set(whh_t)
            bias = bias.at[0, c0:c0 + H].set(b)
        w_all.append(W)
        b_all.append(bias)
        prev_h = fwd[1].shape[0]
    return jnp.stack(w_all).astype(jnp.bfloat16), jnp.stack(b_all)  # (L,2Dp,Dp),(L,1,Dp)


def bdrnn_ae_forward(x, packed, *, out_h, Hp, Bp, fuse_whh):
    w_all, b_all = packed
    L = w_all.shape[0]
    Dp = 2 * Hp
    B, T, Din = x.shape

    # batch-first -> time-major, pad batch to Bp / features to Dp, flatten rows.
    xt = jnp.transpose(x, (1, 0, 2))                               # (T, B, Din)
    xt = jnp.pad(xt, ((0, 0), (0, Bp - B), (0, Dp - Din)))
    x_k = xt.reshape(T * Bp, Dp).astype(jnp.bfloat16)

    out = pl.pallas_call(
        functools.partial(bdrnn_fused_kernel, T=T, Bp=Bp, Hp=Hp,
                          fuse_whh=fuse_whh),
        grid=(L,),
        in_specs=[
            pl.BlockSpec((T * Bp, Dp), lambda l: (0, 0)),          # x (resident)
            pl.BlockSpec((1, 2 * Dp, Dp), lambda l: (l, 0, 0)),    # [Wih; Whh][l]
            pl.BlockSpec((1, 1, Dp), lambda l: (l, 0, 0)),         # bias[l]
        ],
        # Output is the resident cross-layer activation carry (constant block
        # index across the layer axis); written in full every layer.
        out_specs=pl.BlockSpec((T * Bp, Dp), lambda l: (0, 0)),
        out_shape=jax.ShapeDtypeStruct((T * Bp, Dp), jnp.float32),
        scratch_shapes=[pltpu.VMEM((T * Bp, Dp), jnp.float32)],    # hoisted x@Wih+b
        compiler_params=pltpu.CompilerParams(
            # Layer axis carries state -> must stay "arbitrary" (a future
            # megacore "parallel" axis must be a separate batch-tile axis).
            dimension_semantics=("arbitrary",),
            vmem_limit_bytes=32 * 1024 * 1024),
    )(x_k, w_all, b_all)

    out = out.reshape(T, Bp, Dp)[:, :B]                            # drop batch padding
    dec = jnp.concatenate([out[..., :out_h], out[..., Hp:Hp + out_h]], axis=-1)
    return jnp.transpose(dec, (1, 0, 2))                           # (B, T, 2*out_h)


# ----------------------------------------------------------------------------
# Deterministic parameter construction (mirrors nn.RNN per-layer/per-direction).
# ----------------------------------------------------------------------------
def init_dir(key, din, h):
    s = 1.0 / (h ** 0.5)
    k1, k2, k3, k4 = jax.random.split(key, 4)
    wih_t = jax.random.uniform(k1, (din, h), jnp.float32, -s, s)   # transposed vs torch
    whh_t = jax.random.uniform(k2, (h, h), jnp.float32, -s, s)
    bias = (jax.random.uniform(k3, (h,), jnp.float32, -s, s)
            + jax.random.uniform(k4, (h,), jnp.float32, -s, s))    # b_ih + b_hh
    return wih_t, whh_t, bias


def init_bd_rnn(key, num_layers, input_size, hidden_size):
    layers = []
    for l in range(num_layers):
        din = input_size if l == 0 else 2 * hidden_size
        key, kf, kb = jax.random.split(key, 3)
        layers.append((init_dir(kf, din, hidden_size),
                       init_dir(kb, din, hidden_size)))
    return layers, key


# ----------------------------------------------------------------------------
# Pure-JAX reference with the SAME precision policy as the kernel
# (bf16 matmul operands, f32 accumulation / hidden carry / bias / tanh).
# ----------------------------------------------------------------------------
def _ref_direction(x_btd, wih_t, whh_t, bias):
    B = x_btd.shape[0]
    H = whh_t.shape[0]
    wih_b = wih_t.astype(jnp.bfloat16)
    whh_b = whh_t.astype(jnp.bfloat16)

    def step(h, x_t):
        pre = (jnp.dot(x_t.astype(jnp.bfloat16), wih_b, preferred_element_type=jnp.float32)
               + jnp.dot(h.astype(jnp.bfloat16), whh_b, preferred_element_type=jnp.float32)
               + bias)
        h_new = jnp.tanh(pre)
        return h_new, h_new

    _, ys = lax.scan(step, jnp.zeros((B, H), jnp.float32),
                     jnp.transpose(x_btd, (1, 0, 2)))
    return jnp.transpose(ys, (1, 0, 2))


def _ref_bidirectional(x, layers):
    h = x
    for fwd, bwd in layers:
        f = _ref_direction(h, *fwd)
        r = jnp.flip(_ref_direction(jnp.flip(h, axis=1), *bwd), axis=1)
        h = jnp.concatenate([f, r], axis=-1)
    return h


if __name__ == "__main__":
    # Small shapes implied by the module: x is (B, T, input_size).
    B, T = 2, 8
    input_size, hidden_size, num_layers = 8, 16, 2
    out_h = input_size // 2                      # decoder hidden size (output_size // 2)

    key = jax.random.PRNGKey(0)
    key, kx = jax.random.split(key)
    x = jax.random.normal(kx, (B, T, input_size), jnp.float32)

    # Encoder: nn.RNN(input_size, hidden_size, num_layers, bidirectional=True)
    enc_layers, key = init_bd_rnn(key, num_layers, input_size, hidden_size)
    # Decoder: nn.RNN(hidden_size*2, input_size//2, num_layers, bidirectional=True)
    dec_layers, key = init_bd_rnn(key, num_layers, 2 * hidden_size, out_h)
    all_layers = enc_layers + dec_layers         # chained exactly like enc -> dec

    Hp = _round_up(max(hidden_size, out_h), 128)  # lane-dense padded hidden
    Bp = _round_up(B, 8)                          # sublane-aligned padded batch
    packed = pack_params(all_layers, input_size, Hp)
    fuse_whh = _prefer_fused_whh()                # 256-wide Whh on v6e/v7x only

    fwd_fn = jax.jit(functools.partial(bdrnn_ae_forward, packed=packed,
                                       out_h=out_h, Hp=Hp, Bp=Bp,
                                       fuse_whh=fuse_whh))
    out = fwd_fn(x)
    jax.block_until_ready(out)

    ref = _ref_bidirectional(x, all_layers)
    assert out.shape == (B, T, 2 * out_h), out.shape
    assert jnp.allclose(out, ref, atol=5e-3, rtol=5e-3), \
        float(jnp.max(jnp.abs(out - ref)))

    print("KERNEL_OK")
</pallas_src>

<mosaic_0001>
module attributes {stable_mosaic.version = 11 : i64} {
  func.func @bdrnn_fused_kernel(%arg0: i32, %arg1: memref<64x256xbf16, #tpu.memory_space<vmem>>, %arg2: memref<1x512x256xbf16, #tpu.memory_space<vmem>>, %arg3: memref<1x1x256xf32, #tpu.memory_space<vmem>>, %arg4: memref<64x256xf32, #tpu.memory_space<vmem>>, %arg5: memref<64x256xf32, #tpu.memory_space<vmem>>) attributes {dimension_semantics = [#tpu.dimension_semantics<arbitrary>], iteration_bounds = array<i64: 4>, scalar_prefetch = 0 : i64, scratch_operands = 1 : i64, tpu.core_type = #tpu.core_type<tc>, window_params = [{pipeline_mode = #tpu.pipeline_mode<synchronous>, transform_indices = @transform_0, window_bounds = array<i64: 64, 256>}, {transform_indices = @transform_1, window_bounds = array<i64: 1, 512, 256>}, {transform_indices = @transform_2, window_bounds = array<i64: 1, 1, 256>}, {pipeline_mode = #tpu.pipeline_mode<synchronous>, transform_indices = @transform_3, window_bounds = array<i64: 64, 256>}]} {
    %c0 = arith.constant 0 : index
    %c0_0 = arith.constant 0 : index
    %c0_1 = arith.constant 0 : index
    %0 = vector.load %arg2[%c0, %c0_0, %c0_1] : memref<1x512x256xbf16, #tpu.memory_space<vmem>>, vector<1x256x256xbf16>
    %1 = vector.shape_cast %0 : vector<1x256x256xbf16> to vector<256x256xbf16>
    %c0_2 = arith.constant 0 : index
    %c0_3 = arith.constant 0 : index
    %c0_4 = arith.constant 0 : index
    %2 = vector.load %arg3[%c0_2, %c0_3, %c0_4] : memref<1x1x256xf32, #tpu.memory_space<vmem>>, vector<1x1x256xf32>
    %3 = vector.shape_cast %2 : vector<1x1x256xf32> to vector<1x256xf32>
    %c0_i32 = arith.constant 0 : i32
    %4 = arith.cmpi eq, %arg0, %c0_i32 : i32
    %5 = arith.extui %4 : i1 to i32
    %c0_i32_5 = arith.constant 0 : i32
    %6 = arith.cmpi ne, %5, %c0_i32_5 : i32
    scf.if %6 {
      %c0_85 = arith.constant 0 : index
      %c0_86 = arith.constant 0 : index
      %112 = vector.load %arg1[%c0_85, %c0_86] : memref<64x256xbf16, #tpu.memory_space<vmem>>, vector<64x256xbf16>
      %cst_87 = arith.constant dense<0.000000e+00> : vector<64x256xf32>
      %113 = tpu.matmul %112, %1, %cst_87 {dimension_numbers = #tpu.dot_dimension_numbers<[1], [0], [0], [1], [0, 0, 1, 1], [], []>} : vector<64x256xbf16>, vector<256x256xbf16>, vector<64x256xf32> -> vector<64x256xf32>
      %114 = vector.broadcast %3 : vector<1x256xf32> to vector<64x256xf32>
      %115 = arith.addf %113, %114 : vector<64x256xf32>
      %c0_88 = arith.constant 0 : index
      %c0_89 = arith.constant 0 : index
      %116 = vector.load %arg5[%c0_88, %c0_89] : memref<64x256xf32, #tpu.memory_space<vmem>>, vector<64x256xf32>
      tpu.vector_store %arg5[%c0_88, %c0_89], %115 {strides = array<i32>} : memref<64x256xf32, #tpu.memory_space<vmem>>, vector<64x256xf32>,
    } else {
    }
    %c0_i32_6 = arith.constant 0 : i32
    %7 = arith.cmpi ne, %arg0, %c0_i32_6 : i32
    %8 = arith.extui %7 : i1 to i32
    %c0_i32_7 = arith.constant 0 : i32
    %9 = arith.cmpi ne, %8, %c0_i32_7 : i32
    scf.if %9 {
      %c0_85 = arith.constant 0 : index
      %c0_86 = arith.constant 0 : index
      %112 = vector.load %arg4[%c0_85, %c0_86] : memref<64x256xf32, #tpu.memory_space<vmem>>, vector<64x256xf32>
      %113 = arith.truncf %112 : vector<64x256xf32> to vector<64x256xbf16>
      %cst_87 = arith.constant dense<0.000000e+00> : vector<64x256xf32>
      %114 = tpu.matmul %113, %1, %cst_87 {dimension_numbers = #tpu.dot_dimension_numbers<[1], [0], [0], [1], [0, 0, 1, 1], [], []>} : vector<64x256xbf16>, vector<256x256xbf16>, vector<64x256xf32> -> vector<64x256xf32>
      %115 = vector.broadcast %3 : vector<1x256xf32> to vector<64x256xf32>
      %116 = arith.addf %114, %115 : vector<64x256xf32>
      %c0_88 = arith.constant 0 : index
      %c0_89 = arith.constant 0 : index
      %117 = vector.load %arg5[%c0_88, %c0_89] : memref<64x256xf32, #tpu.memory_space<vmem>>, vector<64x256xf32>
      tpu.vector_store %arg5[%c0_88, %c0_89], %116 {strides = array<i32>} : memref<64x256xf32, #tpu.memory_space<vmem>>, vector<64x256xf32>,
    } else {
    }
    %c0_8 = arith.constant 0 : index
    %c256 = arith.constant 256 : index
    %c0_9 = arith.constant 0 : index
    %10 = vector.load %arg2[%c0_8, %c256, %c0_9] : memref<1x512x256xbf16, #tpu.memory_space<vmem>>, vector<1x128x128xbf16>
    %11 = vector.shape_cast %10 : vector<1x128x128xbf16> to vector<128x128xbf16>
    %c0_10 = arith.constant 0 : index
    %c384 = arith.constant 384 : index
    %c128 = arith.constant 128 : index
    %12 = vector.load %arg2[%c0_10, %c384, %c128] : memref<1x512x256xbf16, #tpu.memory_space<vmem>>, vector<1x128x128xbf16>
    %13 = vector.shape_cast %12 : vector<1x128x128xbf16> to vector<128x128xbf16>
    %cst = arith.constant 0.000000e+00 : f32
    %14 = vector.broadcast %cst : f32 to vector<8x128xf32>
    %cst_11 = arith.constant 0.000000e+00 : f32
    %15 = vector.broadcast %cst_11 : f32 to vector<8x128xf32>
    %16 = arith.truncf %14 : vector<8x128xf32> to vector<8x128xbf16>
    %cst_12 = arith.constant dense<0.000000e+00> : vector<8x128xf32>
    %17 = tpu.matmul %16, %11, %cst_12 {dimension_numbers = #tpu.dot_dimension_numbers<[1], [0], [0], [1], [0, 0, 1, 1], [], []>} : vector<8x128xbf16>, vector<128x128xbf16>, vector<8x128xf32> -> vector<8x128xf32>
    %c0_13 = arith.constant 0 : index
    %c0_14 = arith.constant 0 : index
    %18 = vector.load %arg5[%c0_13, %c0_14] : memref<64x256xf32, #tpu.memory_space<vmem>>, vector<8x128xf32>
    %19 = arith.addf %17, %18 : vector<8x128xf32>
    %20 = math.tanh %19 : vector<8x128xf32>
    %21 = arith.truncf %15 : vector<8x128xf32> to vector<8x128xbf16>
    %cst_15 = arith.constant dense<0.000000e+00> : vector<8x128xf32>
    %22 = tpu.matmul %21, %13, %cst_15 {dimension_numbers = #tpu.dot_dimension_numbers<[1], [0], [0], [1], [0, 0, 1, 1], [], []>} : vector<8x128xbf16>, vector<128x128xbf16>, vector<8x128xf32> -> vector<8x128xf32>
    %c56 = arith.constant 56 : index
    %c128_16 = arith.constant 128 : index
    %23 = vector.load %arg5[%c56, %c128_16] : memref<64x256xf32, #tpu.memory_space<vmem>>, vector<8x128xf32>
    %24 = arith.addf %22, %23 : vector<8x128xf32>
    %25 = math.tanh %24 : vector<8x128xf32>
    %c0_17 = arith.constant 0 : index
    %c0_18 = arith.constant 0 : index
    %26 = vector.load %arg4[%c0_17, %c0_18] : memref<64x256xf32, #tpu.memory_space<vmem>>, vector<8x128xf32>
    tpu.vector_store %arg4[%c0_17, %c0_18], %20 {strides = array<i32>} : memref<64x256xf32, #tpu.memory_space<vmem>>, vector<8x128xf32>,
    %c56_19 = arith.constant 56 : index
    %c128_20 = arith.constant 128 : index
    %27 = vector.load %arg4[%c56_19, %c128_20] : memref<64x256xf32, #tpu.memory_space<vmem>>, vector<8x128xf32>
    tpu.vector_store %arg4[%c56_19, %c128_20], %25 {strides = array<i32>} : memref<64x256xf32, #tpu.memory_space<vmem>>, vector<8x128xf32>,
    %28 = arith.truncf %20 : vector<8x128xf32> to vector<8x128xbf16>
    %cst_21 = arith.constant dense<0.000000e+00> : vector<8x128xf32>
    %29 = tpu.matmul %28, %11, %cst_21 {dimension_numbers = #tpu.dot_dimension_numbers<[1], [0], [0], [1], [0, 0, 1, 1], [], []>} : vector<8x128xbf16>, vector<128x128xbf16>, vector<8x128xf32> -> vector<8x128xf32>
    %c8 = arith.constant 8 : index
    %c0_22 = arith.constant 0 : index
    %30 = vector.load %arg5[%c8, %c0_22] : memref<64x256xf32, #tpu.memory_space<vmem>>, vector<8x128xf32>
    %31 = arith.addf %29, %30 : vector<8x128xf32>
    %32 = math.tanh %31 : vector<8x128xf32>
    %33 = arith.truncf %25 : vector<8x128xf32> to vector<8x128xbf16>
    %cst_23 = arith.constant dense<0.000000e+00> : vector<8x128xf32>
    %34 = tpu.matmul %33, %13, %cst_23 {dimension_numbers = #tpu.dot_dimension_numbers<[1], [0], [0], [1], [0, 0, 1, 1], [], []>} : vector<8x128xbf16>, vector<128x128xbf16>, vector<8x128xf32> -> vector<8x128xf32>
    %c48 = arith.constant 48 : index
    %c128_24 = arith.constant 128 : index
    %35 = vector.load %arg5[%c48, %c128_24] : memref<64x256xf32, #tpu.memory_space<vmem>>, vector<8x128xf32>
    %36 = arith.addf %34, %35 : vector<8x128xf32>
    %37 = math.tanh %36 : vector<8x128xf32>
    %c8_25 = arith.constant 8 : index
    %c0_26 = arith.constant 0 : index
    %38 = vector.load %arg4[%c8_25, %c0_26] : memref<64x256xf32, #tpu.memory_space<vmem>>, vector<8x128xf32>
    tpu.vector_store %arg4[%c8_25, %c0_26], %32 {strides = array<i32>} : memref<64x256xf32, #tpu.memory_space<vmem>>, vector<8x128xf32>,
    %c48_27 = arith.constant 48 : index
    %c128_28 = arith.constant 128 : index
    %39 = vector.load %arg4[%c48_27, %c128_28] : memref<64x256xf32, #tpu.memory_space<vmem>>, vector<8x128xf32>
    tpu.vector_store %arg4[%c48_27, %c128_28], %37 {strides = array<i32>} : memref<64x256xf32, #tpu.memory_space<vmem>>, vector<8x128xf32>,
    %40 = arith.truncf %32 : vector<8x128xf32> to vector<8x128xbf16>
    %cst_29 = arith.constant dense<0.000000e+00> : vector<8x128xf32>
    %41 = tpu.matmul %40, %11, %cst_29 {dimension_numbers = #tpu.dot_dimension_numbers<[1], [0], [0], [1], [0, 0, 1, 1], [], []>} : vector<8x128xbf16>, vector<128x128xbf16>, vector<8x128xf32> -> vector<8x128xf32>
    %c16 = arith.constant 16 : index
    %c0_30 = arith.constant 0 : index
    %42 = vector.load %arg5[%c16, %c0_30] : memref<64x256xf32, #tpu.memory_space<vmem>>, vector<8x128xf32>
    %43 = arith.addf %41, %42 : vector<8x128xf32>
    %44 = math.tanh %43 : vector<8x128xf32>
    %45 = arith.truncf %37 : vector<8x128xf32> to vector<8x128xbf16>
    %cst_31 = arith.constant dense<0.000000e+00> : vector<8x128xf32>
    %46 = tpu.matmul %45, %13, %cst_31 {dimension_numbers = #tpu.dot_dimension_numbers<[1], [0], [0], [1], [0, 0, 1, 1], [], []>} : vector<8x128xbf16>, vector<128x128xbf16>, vector<8x128xf32> -> vector<8x128xf32>
    %c40 = arith.constant 40 : index
    %c128_32 = arith.constant 128 : index
    %47 = vector.load %arg5[%c40, %c128_32] : memref<64x256xf32, #tpu.memory_space<vmem>>, vector<8x128xf32>
    %48 = arith.addf %46, %47 : vector<8x128xf32>
    %49 = math.tanh %48 : vector<8x128xf32>
    %c16_33 = arith.constant 16 : index
    %c0_34 = arith.constant 0 : index
    %50 = vector.load %arg4[%c16_33, %c0_34] : memref<64x256xf32, #tpu.memory_space<vmem>>, vector<8x128xf32>
    tpu.vector_store %arg4[%c16_33, %c0_34], %44 {strides = array<i32>} : memref<64x256xf32, #tpu.memory_space<vmem>>, vector<8x128xf32>,
    %c40_35 = arith.constant 40 : index
    %c128_36 = arith.constant 128 : index
    %51 = vector.load %arg4[%c40_35, %c128_36] : memref<64x256xf32, #tpu.memory_space<vmem>>, vector<8x128xf32>
    tpu.vector_store %arg4[%c40_35, %c128_36], %49 {strides = array<i32>} : memref<64x256xf32, #tpu.memory_space<vmem>>, vector<8x128xf32>,
    %52 = arith.truncf %44 : vector<8x128xf32> to vector<8x128xbf16>
    %cst_37 = arith.constant dense<0.000000e+00> : vector<8x128xf32>
    %53 = tpu.matmul %52, %11, %cst_37 {dimension_numbers = #tpu.dot_dimension_numbers<[1], [0], [0], [1], [0, 0, 1, 1], [], []>} : vector<8x128xbf16>, vector<128x128xbf16>, vector<8x128xf32> -> vector<8x128xf32>
    %c24 = arith.constant 24 : index
    %c0_38 = arith.constant 0 : index
    %54 = vector.load %arg5[%c24, %c0_38] : memref<64x256xf32, #tpu.memory_space<vmem>>, vector<8x128xf32>
    %55 = arith.addf %53, %54 : vector<8x128xf32>
    %56 = math.tanh %55 : vector<8x128xf32>
    %57 = arith.truncf %49 : vector<8x128xf32> to vector<8x128xbf16>
    %cst_39 = arith.constant dense<0.000000e+00> : vector<8x128xf32>
    %58 = tpu.matmul %57, %13, %cst_39 {dimension_numbers = #tpu.dot_dimension_numbers<[1], [0], [0], [1], [0, 0, 1, 1], [], []>} : vector<8x128xbf16>, vector<128x128xbf16>, vector<8x128xf32> -> vector<8x128xf32>
    %c32 = arith.constant 32 : index
    %c128_40 = arith.constant 128 : index
    %59 = vector.load %arg5[%c32, %c128_40] : memref<64x256xf32, #tpu.memory_space<vmem>>, vector<8x128xf32>
    %60 = arith.addf %58, %59 : vector<8x128xf32>
    %61 = math.tanh %60 : vector<8x128xf32>
    %c24_41 = arith.constant 24 : index
    %c0_42 = arith.constant 0 : index
    %62 = vector.load %arg4[%c24_41, %c0_42] : memref<64x256xf32, #tpu.memory_space<vmem>>, vector<8x128xf32>
    tpu.vector_store %arg4[%c24_41, %c0_42], %56 {strides = array<i32>} : memref<64x256xf32, #tpu.memory_space<vmem>>, vector<8x128xf32>,
    %c32_43 = arith.constant 32 : index
    %c128_44 = arith.constant 128 : index
    %63 = vector.load %arg4[%c32_43, %c128_44] : memref<64x256xf32, #tpu.memory_space<vmem>>, vector<8x128xf32>
    tpu.vector_store %arg4[%c32_43, %c128_44], %61 {strides = array<i32>} : memref<64x256xf32, #tpu.memory_space<vmem>>, vector<8x128xf32>,
    %64 = arith.truncf %56 : vector<8x128xf32> to vector<8x128xbf16>
    %cst_45 = arith.constant dense<0.000000e+00> : vector<8x128xf32>
    %65 = tpu.matmul %64, %11, %cst_45 {dimension_numbers = #tpu.dot_dimension_numbers<[1], [0], [0], [1], [0, 0, 1, 1], [], []>} : vector<8x128xbf16>, vector<128x128xbf16>, vector<8x128xf32> -> vector<8x128xf32>
    %c32_46 = arith.constant 32 : index
    %c0_47 = arith.constant 0 : index
    %66 = vector.load %arg5[%c32_46, %c0_47] : memref<64x256xf32, #tpu.memory_space<vmem>>, vector<8x128xf32>
    %67 = arith.addf %65, %66 : vector<8x128xf32>
    %68 = math.tanh %67 : vector<8x128xf32>
    %69 = arith.truncf %61 : vector<8x128xf32> to vector<8x128xbf16>
    %cst_48 = arith.constant dense<0.000000e+00> : vector<8x128xf32>
    %70 = tpu.matmul %69, %13, %cst_48 {dimension_numbers = #tpu.dot_dimension_numbers<[1], [0], [0], [1], [0, 0, 1, 1], [], []>} : vector<8x128xbf16>, vector<128x128xbf16>, vector<8x128xf32> -> vector<8x128xf32>
    %c24_49 = arith.constant 24 : index
    %c128_50 = arith.constant 128 : index
    %71 = vector.load %arg5[%c24_49, %c128_50] : memref<64x256xf32, #tpu.memory_space<vmem>>, vector<8x128xf32>
    %72 = arith.addf %70, %71 : vector<8x128xf32>
    %73 = math.tanh %72 : vector<8x128xf32>
    %c32_51 = arith.constant 32 : index
    %c0_52 = arith.constant 0 : index
    %74 = vector.load %arg4[%c32_51, %c0_52] : memref<64x256xf32, #tpu.memory_space<vmem>>, vector<8x128xf32>
    tpu.vector_store %arg4[%c32_51, %c0_52], %68 {strides = array<i32>} : memref<64x256xf32, #tpu.memory_space<vmem>>, vector<8x128xf32>,
    %c24_53 = arith.constant 24 : index
    %c128_54 = arith.constant 128 : index
    %75 = vector.load %arg4[%c24_53, %c128_54] : memref<64x256xf32, #tpu.memory_space<vmem>>, vector<8x128xf32>
    tpu.vector_store %arg4[%c24_53, %c128_54], %73 {strides = array<i32>} : memref<64x256xf32, #tpu.memory_space<vmem>>, vector<8x128xf32>,
    %76 = arith.truncf %68 : vector<8x128xf32> to vector<8x128xbf16>
    %cst_55 = arith.constant dense<0.000000e+00> : vector<8x128xf32>
    %77 = tpu.matmul %76, %11, %cst_55 {dimension_numbers = #tpu.dot_dimension_numbers<[1], [0], [0], [1], [0, 0, 1, 1], [], []>} : vector<8x128xbf16>, vector<128x128xbf16>, vector<8x128xf32> -> vector<8x128xf32>
    %c40_56 = arith.constant 40 : index
    %c0_57 = arith.constant 0 : index
    %78 = vector.load %arg5[%c40_56, %c0_57] : memref<64x256xf32, #tpu.memory_space<vmem>>, vector<8x128xf32>
    %79 = arith.addf %77, %78 : vector<8x128xf32>
    %80 = math.tanh %79 : vector<8x128xf32>
    %81 = arith.truncf %73 : vector<8x128xf32> to vector<8x128xbf16>
    %cst_58 = arith.constant dense<0.000000e+00> : vector<8x128xf32>
    %82 = tpu.matmul %81, %13, %cst_58 {dimension_numbers = #tpu.dot_dimension_numbers<[1], [0], [0], [1], [0, 0, 1, 1], [], []>} : vector<8x128xbf16>, vector<128x128xbf16>, vector<8x128xf32> -> vector<8x128xf32>
    %c16_59 = arith.constant 16 : index
    %c128_60 = arith.constant 128 : index
    %83 = vector.load %arg5[%c16_59, %c128_60] : memref<64x256xf32, #tpu.memory_space<vmem>>, vector<8x128xf32>
    %84 = arith.addf %82, %83 : vector<8x128xf32>
    %85 = math.tanh %84 : vector<8x128xf32>
    %c40_61 = arith.constant 40 : index
    %c0_62 = arith.constant 0 : index
    %86 = vector.load %arg4[%c40_61, %c0_62] : memref<64x256xf32, #tpu.memory_space<vmem>>, vector<8x128xf32>
    tpu.vector_store %arg4[%c40_61, %c0_62], %80 {strides = array<i32>} : memref<64x256xf32, #tpu.memory_space<vmem>>, vector<8x128xf32>,
    %c16_63 = arith.constant 16 : index
    %c128_64 = arith.constant 128 : index
    %87 = vector.load %arg4[%c16_63, %c128_64] : memref<64x256xf32, #tpu.memory_space<vmem>>, vector<8x128xf32>
    tpu.vector_store %arg4[%c16_63, %c128_64], %85 {strides = array<i32>} : memref<64x256xf32, #tpu.memory_space<vmem>>, vector<8x128xf32>,
    %88 = arith.truncf %80 : vector<8x128xf32> to vector<8x128xbf16>
    %cst_65 = arith.constant dense<0.000000e+00> : vector<8x128xf32>
    %89 = tpu.matmul %88, %11, %cst_65 {dimension_numbers = #tpu.dot_dimension_numbers<[1], [0], [0], [1], [0, 0, 1, 1], [], []>} : vector<8x128xbf16>, vector<128x128xbf16>, vector<8x128xf32> -> vector<8x128xf32>
    %c48_66 = arith.constant 48 : index
    %c0_67 = arith.constant 0 : index
    %90 = vector.load %arg5[%c48_66, %c0_67] : memref<64x256xf32, #tpu.memory_space<vmem>>, vector<8x128xf32>
    %91 = arith.addf %89, %90 : vector<8x128xf32>
    %92 = math.tanh %91 : vector<8x128xf32>
    %93 = arith.truncf %85 : vector<8x128xf32> to vector<8x128xbf16>
    %cst_68 = arith.constant dense<0.000000e+00> : vector<8x128xf32>
    %94 = tpu.matmul %93, %13, %cst_68 {dimension_numbers = #tpu.dot_dimension_numbers<[1], [0], [0], [1], [0, 0, 1, 1], [], []>} : vector<8x128xbf16>, vector<128x128xbf16>, vector<8x128xf32> -> vector<8x128xf32>
    %c8_69 = arith.constant 8 : index
    %c128_70 = arith.constant 128 : index
    %95 = vector.load %arg5[%c8_69, %c128_70] : memref<64x256xf32, #tpu.memory_space<vmem>>, vector<8x128xf32>
    %96 = arith.addf %94, %95 : vector<8x128xf32>
    %97 = math.tanh %96 : vector<8x128xf32>
    %c48_71 = arith.constant 48 : index
    %c0_72 = arith.constant 0 : index
    %98 = vector.load %arg4[%c48_71, %c0_72] : memref<64x256xf32, #tpu.memory_space<vmem>>, vector<8x128xf32>
    tpu.vector_store %arg4[%c48_71, %c0_72], %92 {strides = array<i32>} : memref<64x256xf32, #tpu.memory_space<vmem>>, vector<8x128xf32>,
    %c8_73 = arith.constant 8 : index
    %c128_74 = arith.constant 128 : index
    %99 = vector.load %arg4[%c8_73, %c128_74] : memref<64x256xf32, #tpu.memory_space<vmem>>, vector<8x128xf32>
    tpu.vector_store %arg4[%c8_73, %c128_74], %97 {strides = array<i32>} : memref<64x256xf32, #tpu.memory_space<vmem>>, vector<8x128xf32>,
    %100 = arith.truncf %92 : vector<8x128xf32> to vector<8x128xbf16>
    %cst_75 = arith.constant dense<0.000000e+00> : vector<8x128xf32>
    %101 = tpu.matmul %100, %11, %cst_75 {dimension_numbers = #tpu.dot_dimension_numbers<[1], [0], [0], [1], [0, 0, 1, 1], [], []>} : vector<8x128xbf16>, vector<128x128xbf16>, vector<8x128xf32> -> vector<8x128xf32>
    %c56_76 = arith.constant 56 : index
    %c0_77 = arith.constant 0 : index
    %102 = vector.load %arg5[%c56_76, %c0_77] : memref<64x256xf32, #tpu.memory_space<vmem>>, vector<8x128xf32>
    %103 = arith.addf %101, %102 : vector<8x128xf32>
    %104 = math.tanh %103 : vector<8x128xf32>
    %105 = arith.truncf %97 : vector<8x128xf32> to vector<8x128xbf16>
    %cst_78 = arith.constant dense<0.000000e+00> : vector<8x128xf32>
    %106 = tpu.matmul %105, %13, %cst_78 {dimension_numbers = #tpu.dot_dimension_numbers<[1], [0], [0], [1], [0, 0, 1, 1], [], []>} : vector<8x128xbf16>, vector<128x128xbf16>, vector<8x128xf32> -> vector<8x128xf32>
    %c0_79 = arith.constant 0 : index
    %c128_80 = arith.constant 128 : index
    %107 = vector.load %arg5[%c0_79, %c128_80] : memref<64x256xf32, #tpu.memory_space<vmem>>, vector<8x128xf32>
    %108 = arith.addf %106, %107 : vector<8x128xf32>
    %109 = math.tanh %108 : vector<8x128xf32>
    %c56_81 = arith.constant 56 : index
    %c0_82 = arith.constant 0 : index
    %110 = vector.load %arg4[%c56_81, %c0_82] : memref<64x256xf32, #tpu.memory_space<vmem>>, vector<8x128xf32>
    tpu.vector_store %arg4[%c56_81, %c0_82], %104 {strides = array<i32>} : memref<64x256xf32, #tpu.memory_space<vmem>>, vector<8x128xf32>,
    %c0_83 = arith.constant 0 : index
    %c128_84 = arith.constant 128 : index
    %111 = vector.load %arg4[%c0_83, %c128_84] : memref<64x256xf32, #tpu.memory_space<vmem>>, vector<8x128xf32>
    tpu.vector_store %arg4[%c0_83, %c128_84], %109 {strides = array<i32>} : memref<64x256xf32, #tpu.memory_space<vmem>>, vector<8x128xf32>,
    return
  }
  func.func @transform_0(%arg0: i32) -> (i32, i32) {
    %c0_i32 = arith.constant 0 : i32
    %c0_i32_0 = arith.constant 0 : i32
    %c0_i32_1 = arith.constant 0 : i32
    return %c0_i32, %c0_i32_0 : i32, i32
  }
  func.func @transform_1(%arg0: i32) -> (i32, i32, i32) {
    %c0_i32 = arith.constant 0 : i32
    %c0_i32_0 = arith.constant 0 : i32
    %c0_i32_1 = arith.constant 0 : i32
    return %arg0, %c0_i32, %c0_i32_0 : i32, i32, i32
  }
  func.func @transform_2(%arg0: i32) -> (i32, i32, i32) {
    %c0_i32 = arith.constant 0 : i32
    %c0_i32_0 = arith.constant 0 : i32
    %c0_i32_1 = arith.constant 0 : i32
    return %arg0, %c0_i32, %c0_i32_0 : i32, i32, i32
  }
  func.func @transform_3(%arg0: i32) -> (i32, i32) {
    %c0_i32 = arith.constant 0 : i32
    %c0_i32_0 = arith.constant 0 : i32
    %c0_i32_1 = arith.constant 0 : i32
    return %c0_i32, %c0_i32_0 : i32, i32
  }
}

</mosaic_0001>

<llo_original>
// kernel: bdrnn_ae_forward.1
$region0: #{bdrnn_ae_forward.1}
  #allocation0 [shape = 'u32[]', space=smem, size = 0x4, offset = 0x4, fixed_abs, tag = 'smem constant byte address 0x4 - core index']
  #allocation1 [shape = 'u32[72,128]{1,0:T(1,128)}', space=vmem, size = 0x9000, scoped, tag = 'internal scratch']
  #allocation2 [shape = 'f32[64,256]{1,0:T(8,128)}', space=vmem, size = 0x10000, scoped, tag = 'scratch operand']
  %s0 = inlined_call_operand.vmem [shape: bf16[64,256], index: 0, kind: input, shape index: {}]
  %s1 = inlined_call_operand.hbm [shape: bf16[4,512,256], index: 1, kind: input, shape index: {}]
  %s2 = inlined_call_operand.vmem [shape: f32[4,1,256], index: 2, kind: input, shape index: {}]
  %s3 = inlined_call_operand.vmem [shape: f32[64,256], index: 3, kind: output, shape index: {}]
  %s4 = sld [smem:[#allocation0]]
  $region57: #{bdrnn_ae_forward.1} parent=0
    _
  %s6 = ssub.s32 1, %s4
  %s7 = scalar_select 0, %s6, %s4
  $region1: #{bdrnn_ae_forward.1} parent=0
    #allocation3 [shape = 'u8[524288]{0}', space=vmem, size = 0x80000, scoped, tag = 'input window, operand 1']
    #allocation4 [shape = 's32[2]{0}', space=sflag, size = 0x8, scoped, tag = 'scoped memory for bdrnn_ae_forward.1']
    %8 = vsyncpa [#allocation4], 0
    %s9 = scalar_lea.sflag [#allocation4], 1
    %10 = vsyncpa %s9, 0
    loop: start=0, step=1, limit=6
    $region2: #{bdrnn_ae_forward.1} parent=1 // loop_pre_header
      _
    $region3: #{bdrnn_ae_forward.1} parent=1 // loop_header
      %s12 = sphi 0, %s16
      %p13 = scmp.ge.s32.totalorder %s12, 6
      %s20 = sphi 0, %s20
      %s22 = sphi 0, %s20
      %s23 = sphi 0, %s22
      %s37 = sphi 0, %s23
      %s43 = sphi 0, %s45
      %s46 = sphi 0, %s43
      %s47 = sphi 0, %s46
      %s63 = sphi 0, %s47
      %s69 = sphi 0, %s71
      %s72 = sphi 0, %s69
      %s73 = sphi 0, %s72
      %s89 = sphi 0, %s73
      %s93 = sphi 0, %s93
      %s95 = sphi 0, %s93
      %s96 = sphi 0, %s95
      %s110 = sphi 0, %s96
    $region4: #{bdrnn_ae_forward.1} parent=1 // loop_header_branch
      %15 = sbr.rel (%p13) target = $region8
    $region5: #{bdrnn_ae_forward.1} parent=1 // loop_body
      %s17 = ssub.s32 %s12, 1
      %s18 = ssub.s32 %s12, 2
      %s19 = sadd.s32 %s12, 1
      %s21 = sadd.s32 %s20, 1
      %p24 = scmp.eq.s32.totalorder %s12, 3
      %p25 = scmp.ne.s32.totalorder %s20, %s22
      %p26 = scmp.eq.s32.totalorder %s12, 0
      %p27 = por %p25, %p26
      %p28 = scmp.ne.s32.totalorder %s20, %s22
      %p29 = scmp.eq.s32.totalorder %s17, 3
      %p30 = por %p28, %p29
      %p31 = scmp.ne.s32.totalorder %s22, %s23
      %p32 = scmp.eq.s32.totalorder %s17, 0
      %p33 = por %p31, %p32
      %p34 = scmp.ne.s32.totalorder %s22, %s23
      %p35 = scmp.eq.s32.totalorder %s18, 3
      %p36 = por %p34, %p35
      %p38 = scmp.ne.s32.totalorder %s23, %s37
      %p39 = scmp.eq.s32.totalorder %s18, 0
      %p40 = por %p38, %p39
      %s41 = ssub.s32 %s12, %s19
      %p42 = scmp.eq.s32.totalorder %s41, 0
      %s44 = sadd.s32 %s43, 1
      %s45 = scalar_select %p42, %s43, %s44
      %p48 = pneg %p42
      %p49 = scmp.eq.s32.totalorder %s12, 3
      %p50 = por %p48, %p49
      %p51 = scmp.ne.s32.totalorder %s43, %s46
      %p52 = scmp.eq.s32.totalorder %s12, 0
      %p53 = por %p51, %p52
      %p54 = scmp.ne.s32.totalorder %s43, %s46
      %p55 = scmp.eq.s32.totalorder %s17, 3
      %p56 = por %p54, %p55
      %p57 = scmp.ne.s32.totalorder %s46, %s47
      %p58 = scmp.eq.s32.totalorder %s17, 0
      %p59 = por %p57, %p58
      %p60 = scmp.ne.s32.totalorder %s46, %s47
      %p61 = scmp.eq.s32.totalorder %s18, 3
      %p62 = por %p60, %p61
      %p64 = scmp.ne.s32.totalorder %s47, %s63
      %p65 = scmp.eq.s32.totalorder %s18, 0
      %p66 = por %p64, %p65
      %s67 = ssub.s32 %s12, %s19
      %p68 = scmp.eq.s32.totalorder %s67, 0
      %s70 = sadd.s32 %s69, 1
      %s71 = scalar_select %p68, %s69, %s70
      %p74 = pneg %p68
      %p75 = scmp.eq.s32.totalorder %s12, 3
      %p76 = por %p74, %p75
      %p77 = scmp.ne.s32.totalorder %s69, %s72
      %p78 = scmp.eq.s32.totalorder %s12, 0
      %p79 = por %p77, %p78
      %p80 = scmp.ne.s32.totalorder %s69, %s72
      %p81 = scmp.eq.s32.totalorder %s17, 3
      %p82 = por %p80, %p81
      %p83 = scmp.ne.s32.totalorder %s72, %s73
      %p84 = scmp.eq.s32.totalorder %s17, 0
      %p85 = por %p83, %p84
      %p86 = scmp.ne.s32.totalorder %s72, %s73
      %p87 = scmp.eq.s32.totalorder %s18, 3
      %p88 = por %p86, %p87
      %p90 = scmp.ne.s32.totalorder %s73, %s89
      %p91 = scmp.eq.s32.totalorder %s18, 0
      %p92 = por %p90, %p91
      %s94 = sadd.s32 %s93, 1
      %p97 = scmp.eq.s32.totalorder %s12, 3
      %p98 = scmp.ne.s32.totalorder %s93, %s95
      %p99 = scmp.eq.s32.totalorder %s12, 0
      %p100 = por %p98, %p99
      %p101 = scmp.ne.s32.totalorder %s93, %s95
      %p102 = scmp.eq.s32.totalorder %s17, 3
      %p103 = por %p101, %p102
      %p104 = scmp.ne.s32.totalorder %s95, %s96
      %p105 = scmp.eq.s32.totalorder %s17, 0
      %p106 = por %p104, %p105
      %p107 = scmp.ne.s32.totalorder %s95, %s96
      %p108 = scmp.eq.s32.totalorder %s18, 3
      %p109 = por %p107, %p108
      %p111 = scmp.ne.s32.totalorder %s96, %s110
      %p112 = scmp.eq.s32.totalorder %s18, 0
      %p113 = por %p111, %p112
      %p114 = scmp.le.s32.totalorder 1, %s12
      %p115 = scmp.lt.s32.totalorder %s12, 5
      %p116 = pnand %p114, %p115
      %p117 = pneg %p116
      // Predicated region
      $region9: #{bdrnn_ae_forward.1} parent=5 // pred_check
        _
      $region10: #{bdrnn_ae_forward.1} parent=5 // pred_check_branch
        %119 = sbr.rel (%p116) target = $region12
      $region11: #{bdrnn_ae_forward.1} parent=5 // pred_region
        %s120 = ssub.s32 %s12, 1
        // Predicated region
        $region13: #{bdrnn_ae_forward.1} parent=11 // pred_check
          %p121 = pneg %p33
        $region14: #{bdrnn_ae_forward.1} parent=11 // pred_check_branch
          %123 = sbr.rel (%p121) target = $region16
        $region15: #{bdrnn_ae_forward.1} parent=11 // pred_region
          _
        $region16: #{bdrnn_ae_forward.1} parent=11 // pred_fallthru
          _
      $region12: #{bdrnn_ae_forward.1} parent=5 // pred_fallthru
        _
      %p124 = scmp.lt.s32.totalorder %s12, 4
      // Predicated region
      $region17: #{bdrnn_ae_forward.1} parent=5 // pred_check
        %p125 = pneg %p124
      $region18: #{bdrnn_ae_forward.1} parent=5 // pred_check_branch
        %127 = sbr.rel (%p125) target = $region20
      $region19: #{bdrnn_ae_forward.1} parent=5 // pred_region
        // Predicated region
        $region21: #{bdrnn_ae_forward.1} parent=19 // pred_check
          %p128 = pneg %p53
        $region22: #{bdrnn_ae_forward.1} parent=19 // pred_check_branch
          %130 = sbr.rel (%p128) target = $region24
        $region23: #{bdrnn_ae_forward.1} parent=19 // pred_region
          %s131 = sand.u32 %s43, 1
          %s132 = scalar_lea.sflag [#allocation4], %s131
          %s133 = sand.u32 %s43, 1
          %s134 = smul.addr %s133, 512
          %s135 = scalar_lea.vmem [#allocation3], %s134
          %137 = vsyncadd %s132, 0
          %s138 = smul.addr %s12, 128
          %s139 = smul.addr %s138, 4
          %s140 = scalar_lea.hbm %s1, %s139
          %s141 = sshll.u32 %s140, 4
          %s142 = int_to_ptr.hbm [resolvable:$true] %s141
          %s143 = sshll.u32 %s135, 4
          %s144 = int_to_ptr.vmem [resolvable:$true] %s143
          %149 = dma.hbm_to_vmem [thread:$0]  %s142, 8192, %s144, %s132, 128, 128, 8
        $region24: #{bdrnn_ae_forward.1} parent=19 // pred_fallthru
          _
        // Predicated region
        $region25: #{bdrnn_ae_forward.1} parent=19 // pred_check
          %p150 = pneg %p79
        $region26: #{bdrnn_ae_forward.1} parent=19 // pred_check_branch
          %152 = sbr.rel (%p150) target = $region28
        $region27: #{bdrnn_ae_forward.1} parent=19 // pred_region
          %p153 = scmp.lt.s32.totalorder %s12, 3
          %s154 = scalar_select %p153, %s12, 3
          %s155 = smul.addr %s154, 2
          %s156 = scalar_lea.vmem %s2, %s155
        $region28: #{bdrnn_ae_forward.1} parent=19 // pred_fallthru
          _
      $region20: #{bdrnn_ae_forward.1} parent=5 // pred_fallthru
        _
      %p157 = scmp.le.s32.totalorder 1, %s12
      %p158 = scmp.lt.s32.totalorder %s12, 5
      %p159 = pnand %p157, %p158
      %p160 = pneg %p159
      // Predicated region
      $region29: #{bdrnn_ae_forward.1} parent=5 // pred_check
        _
      $region30: #{bdrnn_ae_forward.1} parent=5 // pred_check_branch
        %162 = sbr.rel (%p159) target = $region32
      $region31: #{bdrnn_ae_forward.1} parent=5 // pred_region
        %s163 = ssub.s32 %s12, 1
        %s164 = sand.u32 %s46, 1
        %s165 = scalar_lea.sflag [#allocation4], %s164
        %s166 = sand.u32 %s46, 1
        %s167 = smul.addr %s166, 512
        %s168 = scalar_lea.vmem [#allocation3], %s167
        // Predicated region
        $region33: #{bdrnn_ae_forward.1} parent=31 // pred_check
          %p169 = pneg %p59
        $region34: #{bdrnn_ae_forward.1} parent=31 // pred_check_branch
          %171 = sbr.rel (%p169) target = $region36
        $region35: #{bdrnn_ae_forward.1} parent=31 // pred_region
          %173 = dma.done %s165, 8192
        $region36: #{bdrnn_ae_forward.1} parent=31 // pred_fallthru
          _
        %p174 = pneg %p33
        %p175 = pneg %p30
        %s176 = sand.u32 %s46, 1
        %s177 = scalar_lea.sflag [#allocation4], %s176
        %s178 = sand.u32 %s46, 1
        %s179 = smul.addr %s178, 512
        %s180 = scalar_lea.vmem [#allocation3], %s179
        %p181 = pneg %p59
        %p182 = pneg %p56
        %p183 = scmp.lt.s32.totalorder %s17, 3
        %s184 = scalar_select %p183, %s17, 3
        %s185 = smul.addr %s184, 2
        %s186 = scalar_lea.vmem %s2, %s185
        %p187 = pneg %p85
        %p188 = pneg %p82
        %p189 = pneg %p106
        %p190 = pneg %p103
        %p191 = scmp.lt.s32.totalorder %s17, 3
        %s192 = scalar_select %p191, %s17, 3
        %s193 = smul.addr %s192, 2
        %s194 = scalar_lea.vmem %s2, %s193
        %v196 = vld [vmem:[%s168] sm:$0xff]
        %v197 = vld [vmem:[%s168 + $0x8] sm:$0xff]
        %v198 = vld [vmem:[%s168 + $0x10] sm:$0xff]
        %v199 = vld [vmem:[%s168 + $0x18] sm:$0xff]
        %v200 = vld [vmem:[%s168 + $0x20] sm:$0xff]
        %v201 = vld [vmem:[%s168 + $0x28] sm:$0xff]
        %v202 = vld [vmem:[%s168 + $0x30] sm:$0xff]
        %v203 = vld [vmem:[%s168 + $0x38] sm:$0xff]
        %v204 = vld [vmem:[%s168 + $0x40] sm:$0xff]
        %v205 = vld [vmem:[%s168 + $0x48] sm:$0xff]
        %v206 = vld [vmem:[%s168 + $0x50] sm:$0xff]
        %v207 = vld [vmem:[%s168 + $0x58] sm:$0xff]
        %v208 = vld [vmem:[%s168 + $0x60] sm:$0xff]
        %v209 = vld [vmem:[%s168 + $0x68] sm:$0xff]
        %v210 = vld [vmem:[%s168 + $0x70] sm:$0xff]
        %v211 = vld [vmem:[%s168 + $0x78] sm:$0xff]
        %v212 = vld [vmem:[%s168 + $0x80] sm:$0xff]
        %v213 = vld [vmem:[%s168 + $0x88] sm:$0xff]
        %v214 = vld [vmem:[%s168 + $0x90] sm:$0xff]
        %v215 = vld [vmem:[%s168 + $0x98] sm:$0xff]
        %v216 = vld [vmem:[%s168 + $0xa0] sm:$0xff]
        %v217 = vld [vmem:[%s168 + $0xa8] sm:$0xff]
        %v218 = vld [vmem:[%s168 + $0xb0] sm:$0xff]
        %v219 = vld [vmem:[%s168 + $0xb8] sm:$0xff]
        %v220 = vld [vmem:[%s168 + $0xc0] sm:$0xff]
        %v221 = vld [vmem:[%s168 + $0xc8] sm:$0xff]
        %v222 = vld [vmem:[%s168 + $0xd0] sm:$0xff]
        %v223 = vld [vmem:[%s168 + $0xd8] sm:$0xff]
        %v224 = vld [vmem:[%s168 + $0xe0] sm:$0xff]
        %v225 = vld [vmem:[%s168 + $0xe8] sm:$0xff]
        %v226 = vld [vmem:[%s168 + $0xf0] sm:$0xff]
        %v227 = vld [vmem:[%s168 + $0xf8] sm:$0xff]
        %v228 = vld [vmem:[%s194] sm:$0x3]
        %p229 = scmp.eq.s32.totalorder %s17, 0
        // Predicated region
        $region37: #{bdrnn_ae_forward.1} parent=31 // pred_check
          %p230 = pneg %p229
        $region38: #{bdrnn_ae_forward.1} parent=31 // pred_check_branch
          %232 = sbr.rel (%p230) target = $region40
        $region39: #{bdrnn_ae_forward.1} parent=31 // pred_region
          %v233 = vld [vmem:[%s0] sm:$0xff]
          %v234 = vld [vmem:[%s0 + $0x8] sm:$0xff]
          %v235 = vld [vmem:[%s0 + $0x10] sm:$0xff]
          %v236 = vld [vmem:[%s0 + $0x18] sm:$0xff]
          %v237 = vld [vmem:[%s0 + $0x20] sm:$0xff]
          %v238 = vld [vmem:[%s0 + $0x28] sm:$0xff]
          %v239 = vld [vmem:[%s0 + $0x30] sm:$0xff]
          %v240 = vld [vmem:[%s0 + $0x38] sm:$0xff]
          %v242 = vperm.slane %v228, 0
          %v243 = vperm.slane %v228, 1
          %v254 = vunpack.c.l.b16 %v233
          %v255 = vunpack.c.h.b16 %v233
          %v256 = vunpack.c.l.b16 %v234
          %v257 = vunpack.c.h.b16 %v234
          %v258 = vunpack.c.l.b16 %v235
          %v259 = vunpack.c.h.b16 %v235
          %v260 = vunpack.c.l.b16 %v236
          %v261 = vunpack.c.h.b16 %v236
          %v262 = vunpack.c.l.b16 %v237
          %v263 = vunpack.c.h.b16 %v237
          %v264 = vunpack.c.l.b16 %v238
          %v265 = vunpack.c.h.b16 %v238
          %v266 = vunpack.c.l.b16 %v239
          %v267 = vunpack.c.h.b16 %v239
          %v268 = vunpack.c.l.b16 %v240
          %v269 = vunpack.c.h.b16 %v240
          %v270 = vpack.c.b16 %v256, %v254
          %v271 = vpack.c.b16 %v257, %v255
          %v272 = vpack.c.b16 %v260, %v258
          %v273 = vpack.c.b16 %v261, %v259
          %v274 = vpack.c.b16 %v264, %v262
          %v275 = vpack.c.b16 %v265, %v263
          %v276 = vpack.c.b16 %v268, %v266
          %v277 = vpack.c.b16 %v269, %v267
          %v318 = vunpack.c.l.b16 %v196
          %v319 = vunpack.c.h.b16 %v196
          %v320 = vunpack.c.l.b16 %v197
          %v321 = vunpack.c.h.b16 %v197
          %v322 = vunpack.c.l.b16 %v198
          %v323 = vunpack.c.h.b16 %v198
          %v324 = vunpack.c.l.b16 %v199
          %v325 = vunpack.c.h.b16 %v199
          %v326 = vunpack.c.l.b16 %v200
          %v327 = vunpack.c.h.b16 %v200
          %v328 = vunpack.c.l.b16 %v201
          %v329 = vunpack.c.h.b16 %v201
          %v330 = vunpack.c.l.b16 %v202
          %v331 = vunpack.c.h.b16 %v202
          %v332 = vunpack.c.l.b16 %v203
          %v333 = vunpack.c.h.b16 %v203
          %v334 = vunpack.c.l.b16 %v204
          %v335 = vunpack.c.h.b16 %v204
          %v336 = vunpack.c.l.b16 %v205
          %v337 = vunpack.c.h.b16 %v205
          %v338 = vunpack.c.l.b16 %v206
          %v339 = vunpack.c.h.b16 %v206
          %v340 = vunpack.c.l.b16 %v207
          %v341 = vunpack.c.h.b16 %v207
          %v342 = vunpack.c.l.b16 %v208
          %v343 = vunpack.c.h.b16 %v208
          %v344 = vunpack.c.l.b16 %v209
          %v345 = vunpack.c.h.b16 %v209
          %v346 = vunpack.c.l.b16 %v210
          %v347 = vunpack.c.h.b16 %v210
          %v348 = vunpack.c.l.b16 %v211
          %v349 = vunpack.c.h.b16 %v211
          %v350 = vunpack.c.l.b16 %v212
          %v351 = vunpack.c.h.b16 %v212
          %v352 = vunpack.c.l.b16 %v213
          %v353 = vunpack.c.h.b16 %v213
          %v354 = vunpack.c.l.b16 %v214
          %v355 = vunpack.c.h.b16 %v214
          %v356 = vunpack.c.l.b16 %v215
          %v357 = vunpack.c.h.b16 %v215
          %v358 = vunpack.c.l.b16 %v216
          %v359 = vunpack.c.h.b16 %v216
          %v360 = vunpack.c.l.b16 %v217
          %v361 = vunpack.c.h.b16 %v217
          %v362 = vunpack.c.l.b16 %v218
          %v363 = vunpack.c.h.b16 %v218
          %v364 = vunpack.c.l.b16 %v219
          %v365 = vunpack.c.h.b16 %v219
          %v366 = vunpack.c.l.b16 %v220
          %v367 = vunpack.c.h.b16 %v220
          %v368 = vunpack.c.l.b16 %v221
          %v369 = vunpack.c.h.b16 %v221
          %v370 = vunpack.c.l.b16 %v222
          %v371 = vunpack.c.h.b16 %v222
          %v372 = vunpack.c.l.b16 %v223
          %v373 = vunpack.c.h.b16 %v223
          %v374 = vunpack.c.l.b16 %v224
          %v375 = vunpack.c.h.b16 %v224
          %v376 = vunpack.c.l.b16 %v225
          %v377 = vunpack.c.h.b16 %v225
          %v378 = vunpack.c.l.b16 %v226
          %v379 = vunpack.c.h.b16 %v226
          %v380 = vunpack.c.l.b16 %v227
          %v381 = vunpack.c.h.b16 %v227
          %v382 = vpack.c.b16 %v320, %v318
          %v383 = vpack.c.b16 %v321, %v319
          %v384 = vpack.c.b16 %v324, %v322
          %v385 = vpack.c.b16 %v325, %v323
          %v386 = vpack.c.b16 %v328, %v326
          %v387 = vpack.c.b16 %v329, %v327
          %v388 = vpack.c.b16 %v332, %v330
          %v389 = vpack.c.b16 %v333, %v331
          %v390 = vpack.c.b16 %v336, %v334
          %v391 = vpack.c.b16 %v337, %v335
          %v392 = vpack.c.b16 %v340, %v338
          %v393 = vpack.c.b16 %v341, %v339
          %v394 = vpack.c.b16 %v344, %v342
          %v395 = vpack.c.b16 %v345, %v343
          %v396 = vpack.c.b16 %v348, %v346
          %v397 = vpack.c.b16 %v349, %v347
          %v398 = vpack.c.b16 %v352, %v350
          %v399 = vpack.c.b16 %v353, %v351
          %v400 = vpack.c.b16 %v356, %v354
          %v401 = vpack.c.b16 %v357, %v355
          %v402 = vpack.c.b16 %v360, %v358
          %v403 = vpack.c.b16 %v361, %v359
          %v404 = vpack.c.b16 %v364, %v362
          %v405 = vpack.c.b16 %v365, %v363
          %v406 = vpack.c.b16 %v368, %v366
          %v407 = vpack.c.b16 %v369, %v367
          %v408 = vpack.c.b16 %v372, %v370
          %v409 = vpack.c.b16 %v373, %v371
          %v410 = vpack.c.b16 %v376, %v374
          %v411 = vpack.c.b16 %v377, %v375
          %v412 = vpack.c.b16 %v380, %v378
          %v413 = vpack.c.b16 %v381, %v379
          %446 = vmatpush.bf16.msra.mxu0 %v396
          %447 = vmatpush.bf16.msra.mxu0 %v394
          %448 = vmatpush.bf16.msra.mxu0 %v392
          %449 = vmatpush.bf16.msra.mxu0 %v390
          %450 = vmatpush.bf16.msra.mxu0 %v388
          %451 = vmatpush.bf16.msra.mxu0 %v386
          %452 = vmatpush.bf16.msra.mxu0 %v384
          %453 = vmatpush.bf16.msra.mxu0 %v382
          %454 = vmatmul.bf16.gmra.mxu0 %v270
          %v455 = vpop.f32.mrf.mxu0
          %v456 = vadd.f32 %v242, %v455
          %v457 = vpop.f32.mrf.mxu0
          %v458 = vadd.f32 %v242, %v457
          %459 = vmatmul.bf16.gmra.mxu0 %v272
          %v460 = vpop.f32.mrf.mxu0
          %v461 = vadd.f32 %v242, %v460
          %v462 = vpop.f32.mrf.mxu0
          %v463 = vadd.f32 %v242, %v462
          %464 = vmatmul.bf16.gmra.mxu0 %v274
          %v465 = vpop.f32.mrf.mxu0
          %v466 = vadd.f32 %v242, %v465
          %v467 = vpop.f32.mrf.mxu0
          %v468 = vadd.f32 %v242, %v467
          %469 = vmatmul.bf16.gmra.mxu0 %v276
          %v470 = vpop.f32.mrf.mxu0
          %v471 = vadd.f32 %v242, %v470
          %v472 = vpop.f32.mrf.mxu0
          %v473 = vadd.f32 %v242, %v472
          %474 = vdwg.mxu0
          %475 = vmatpush.bf16.msra.mxu0 %v412
          %476 = vmatpush.bf16.msra.mxu0 %v410
          %477 = vmatpush.bf16.msra.mxu0 %v408
          %478 = vmatpush.bf16.msra.mxu0 %v406
          %479 = vmatpush.bf16.msra.mxu0 %v404
          %480 = vmatpush.bf16.msra.mxu0 %v402
          %481 = vmatpush.bf16.msra.mxu0 %v400
          %482 = vmatpush.bf16.msra.mxu0 %v398
          %483 = vmatmul.bf16.gmra.mxu0 %v271
          %v484 = vpop.f32.mrf.mxu0
          %v485 = vadd.f32 %v456, %v484
          %v486 = vpop.f32.mrf.mxu0
          %v487 = vadd.f32 %v458, %v486
          %488 = vmatmul.bf16.gmra.mxu0 %v273
          %v489 = vpop.f32.mrf.mxu0
          %v490 = vadd.f32 %v461, %v489
          %v491 = vpop.f32.mrf.mxu0
          %v492 = vadd.f32 %v463, %v491
          %493 = vmatmul.bf16.gmra.mxu0 %v275
          %v494 = vpop.f32.mrf.mxu0
          %v495 = vadd.f32 %v466, %v494
          %v496 = vpop.f32.mrf.mxu0
          %v497 = vadd.f32 %v468, %v496
          %498 = vmatmul.bf16.gmra.mxu0 %v277
          %v499 = vpop.f32.mrf.mxu0
          %v500 = vadd.f32 %v471, %v499
          %v501 = vpop.f32.mrf.mxu0
          %v502 = vadd.f32 %v473, %v501
          %503 = vdwg.mxu0
          %504 = vmatpush.bf16.msra.mxu0 %v397
          %505 = vmatpush.bf16.msra.mxu0 %v395
          %506 = vmatpush.bf16.msra.mxu0 %v393
          %507 = vmatpush.bf16.msra.mxu0 %v391
          %508 = vmatpush.bf16.msra.mxu0 %v389
          %509 = vmatpush.bf16.msra.mxu0 %v387
          %510 = vmatpush.bf16.msra.mxu0 %v385
          %511 = vmatpush.bf16.msra.mxu0 %v383
          %512 = vmatmul.bf16.gmra.mxu0 %v270
          %v513 = vpop.f32.mrf.mxu0
          %v514 = vadd.f32 %v243, %v513
          %v515 = vpop.f32.mrf.mxu0
          %v516 = vadd.f32 %v243, %v515
          %517 = vmatmul.bf16.gmra.mxu0 %v272
          %v518 = vpop.f32.mrf.mxu0
          %v519 = vadd.f32 %v243, %v518
          %v520 = vpop.f32.mrf.mxu0
          %v521 = vadd.f32 %v243, %v520
          %522 = vmatmul.bf16.gmra.mxu0 %v274
          %v523 = vpop.f32.mrf.mxu0
          %v524 = vadd.f32 %v243, %v523
          %v525 = vpop.f32.mrf.mxu0
          %v526 = vadd.f32 %v243, %v525
          %527 = vmatmul.bf16.gmra.mxu0 %v276
          %v528 = vpop.f32.mrf.mxu0
          %v529 = vadd.f32 %v243, %v528
          %v530 = vpop.f32.mrf.mxu0
          %v531 = vadd.f32 %v243, %v530
          %532 = vdwg.mxu0
          %533 = vmatpush.bf16.msra.mxu0 %v413
          %534 = vmatpush.bf16.msra.mxu0 %v411
          %535 = vmatpush.bf16.msra.mxu0 %v409
          %536 = vmatpush.bf16.msra.mxu0 %v407
          %537 = vmatpush.bf16.msra.mxu0 %v405
          %538 = vmatpush.bf16.msra.mxu0 %v403
          %539 = vmatpush.bf16.msra.mxu0 %v401
          %540 = vmatpush.bf16.msra.mxu0 %v399
          %541 = vmatmul.bf16.gmra.mxu0 %v271
          %v542 = vpop.f32.mrf.mxu0
          %v543 = vadd.f32 %v514, %v542
          %v544 = vpop.f32.mrf.mxu0
          %v545 = vadd.f32 %v516, %v544
          %546 = vmatmul.bf16.gmra.mxu0 %v273
          %v547 = vpop.f32.mrf.mxu0
          %v548 = vadd.f32 %v519, %v547
          %v549 = vpop.f32.mrf.mxu0
          %v550 = vadd.f32 %v521, %v549
          %551 = vmatmul.bf16.gmra.mxu0 %v275
          %v552 = vpop.f32.mrf.mxu0
          %v553 = vadd.f32 %v524, %v552
          %v554 = vpop.f32.mrf.mxu0
          %v555 = vadd.f32 %v526, %v554
          %556 = vmatmul.bf16.gmra.mxu0 %v277
          %v557 = vpop.f32.mrf.mxu0
          %v558 = vadd.f32 %v529, %v557
          %v559 = vpop.f32.mrf.mxu0
          %v560 = vadd.f32 %v531, %v559
          %561 = vdwg.mxu0
          %562 = vst [vmem:[#allocation2] sm:$0xff] %v485
          %563 = vst [vmem:[#allocation2 + $0x8] sm:$0xff] %v543
          %564 = vst [vmem:[#allocation2 + $0x10] sm:$0xff] %v487
          %565 = vst [vmem:[#allocation2 + $0x18] sm:$0xff] %v545
          %566 = vst [vmem:[#allocation2 + $0x20] sm:$0xff] %v490
          %567 = vst [vmem:[#allocation2 + $0x28] sm:$0xff] %v548
          %568 = vst [vmem:[#allocation2 + $0x30] sm:$0xff] %v492
          %569 = vst [vmem:[#allocation2 + $0x38] sm:$0xff] %v550
          %570 = vst [vmem:[#allocation2 + $0x40] sm:$0xff] %v495
          %571 = vst [vmem:[#allocation2 + $0x48] sm:$0xff] %v553
          %572 = vst [vmem:[#allocation2 + $0x50] sm:$0xff] %v497
          %573 = vst [vmem:[#allocation2 + $0x58] sm:$0xff] %v555
          %574 = vst [vmem:[#allocation2 + $0x60] sm:$0xff] %v500
          %575 = vst [vmem:[#allocation2 + $0x68] sm:$0xff] %v558
          %576 = vst [vmem:[#allocation2 + $0x70] sm:$0xff] %v502
          %577 = vst [vmem:[#allocation2 + $0x78] sm:$0xff] %v560
        $region40: #{bdrnn_ae_forward.1} parent=31 // pred_fallthru
          _
        %p578 = scmp.ne.s32.totalorder %s17, 0
        // Predicated region
        $region41: #{bdrnn_ae_forward.1} parent=31 // pred_check
          %p579 = pneg %p578
        $region42: #{bdrnn_ae_forward.1} parent=31 // pred_check_branch
          %581 = sbr.rel (%p579) target = $region44
        $region43: #{bdrnn_ae_forward.1} parent=31 // pred_region
          %v582 = vld [vmem:[%s3] sm:$0xff]
          %v583 = vld [vmem:[%s3 + $0x8] sm:$0xff]
          %v584 = vld [vmem:[%s3 + $0x10] sm:$0xff]
          %v585 = vld [vmem:[%s3 + $0x18] sm:$0xff]
          %v586 = vld [vmem:[%s3 + $0x20] sm:$0xff]
          %v587 = vld [vmem:[%s3 + $0x28] sm:$0xff]
          %v588 = vld [vmem:[%s3 + $0x30] sm:$0xff]
          %v589 = vld [vmem:[%s3 + $0x38] sm:$0xff]
          %v590 = vld [vmem:[%s3 + $0x40] sm:$0xff]
          %v591 = vld [vmem:[%s3 + $0x48] sm:$0xff]
          %v592 = vld [vmem:[%s3 + $0x50] sm:$0xff]
          %v593 = vld [vmem:[%s3 + $0x58] sm:$0xff]
          %v594 = vld [vmem:[%s3 + $0x60] sm:$0xff]
          %v595 = vld [vmem:[%s3 + $0x68] sm:$0xff]
          %v596 = vld [vmem:[%s3 + $0x70] sm:$0xff]
          %v597 = vld [vmem:[%s3 + $0x78] sm:$0xff]
          %v598 = vpack.c.bf16 %v584, %v582
          %v599 = vpack.c.bf16 %v585, %v583
          %v600 = vpack.c.bf16 %v588, %v586
          %v601 = vpack.c.bf16 %v589, %v587
          %v602 = vpack.c.bf16 %v592, %v590
          %v603 = vpack.c.bf16 %v593, %v591
          %v604 = vpack.c.bf16 %v596, %v594
          %v605 = vpack.c.bf16 %v597, %v595
          %v607 = vperm.slane %v228, 0
          %v608 = vperm.slane %v228, 1
          %v643 = vunpack.c.l.b16 %v196
          %v644 = vunpack.c.h.b16 %v196
          %v645 = vunpack.c.l.b16 %v197
          %v646 = vunpack.c.h.b16 %v197
          %v647 = vunpack.c.l.b16 %v198
          %v648 = vunpack.c.h.b16 %v198
          %v649 = vunpack.c.l.b16 %v199
          %v650 = vunpack.c.h.b16 %v199
          %v651 = vunpack.c.l.b16 %v200
          %v652 = vunpack.c.h.b16 %v200
          %v653 = vunpack.c.l.b16 %v201
          %v654 = vunpack.c.h.b16 %v201
          %v655 = vunpack.c.l.b16 %v202
          %v656 = vunpack.c.h.b16 %v202
          %v657 = vunpack.c.l.b16 %v203
          %v658 = vunpack.c.h.b16 %v203
          %v659 = vunpack.c.l.b16 %v204
          %v660 = vunpack.c.h.b16 %v204
          %v661 = vunpack.c.l.b16 %v205
          %v662 = vunpack.c.h.b16 %v205
          %v663 = vunpack.c.l.b16 %v206
          %v664 = vunpack.c.h.b16 %v206
          %v665 = vunpack.c.l.b16 %v207
          %v666 = vunpack.c.h.b16 %v207
          %v667 = vunpack.c.l.b16 %v208
          %v668 = vunpack.c.h.b16 %v208
          %v669 = vunpack.c.l.b16 %v209
          %v670 = vunpack.c.h.b16 %v209
          %v671 = vunpack.c.l.b16 %v210
          %v672 = vunpack.c.h.b16 %v210
          %v673 = vunpack.c.l.b16 %v211
          %v674 = vunpack.c.h.b16 %v211
          %v675 = vunpack.c.l.b16 %v212
          %v676 = vunpack.c.h.b16 %v212
          %v677 = vunpack.c.l.b16 %v213
          %v678 = vunpack.c.h.b16 %v213
          %v679 = vunpack.c.l.b16 %v214
          %v680 = vunpack.c.h.b16 %v214
          %v681 = vunpack.c.l.b16 %v215
          %v682 = vunpack.c.h.b16 %v215
          %v683 = vunpack.c.l.b16 %v216
          %v684 = vunpack.c.h.b16 %v216
          %v685 = vunpack.c.l.b16 %v217
          %v686 = vunpack.c.h.b16 %v217
          %v687 = vunpack.c.l.b16 %v218
          %v688 = vunpack.c.h.b16 %v218
          %v689 = vunpack.c.l.b16 %v219
          %v690 = vunpack.c.h.b16 %v219
          %v691 = vunpack.c.l.b16 %v220
          %v692 = vunpack.c.h.b16 %v220
          %v693 = vunpack.c.l.b16 %v221
          %v694 = vunpack.c.h.b16 %v221
          %v695 = vunpack.c.l.b16 %v222
          %v696 = vunpack.c.h.b16 %v222
          %v697 = vunpack.c.l.b16 %v223
          %v698 = vunpack.c.h.b16 %v223
          %v699 = vunpack.c.l.b16 %v224
          %v700 = vunpack.c.h.b16 %v224
          %v701 = vunpack.c.l.b16 %v225
          %v702 = vunpack.c.h.b16 %v225
          %v703 = vunpack.c.l.b16 %v226
          %v704 = vunpack.c.h.b16 %v226
          %v705 = vunpack.c.l.b16 %v227
          %v706 = vunpack.c.h.b16 %v227
          %v707 = vpack.c.b16 %v645, %v643
          %v708 = vpack.c.b16 %v646, %v644
          %v709 = vpack.c.b16 %v649, %v647
          %v710 = vpack.c.b16 %v650, %v648
          %v711 = vpack.c.b16 %v653, %v651
          %v712 = vpack.c.b16 %v654, %v652
          %v713 = vpack.c.b16 %v657, %v655
          %v714 = vpack.c.b16 %v658, %v656
          %v715 = vpack.c.b16 %v661, %v659
          %v716 = vpack.c.b16 %v662, %v660
          %v717 = vpack.c.b16 %v665, %v663
          %v718 = vpack.c.b16 %v666, %v664
          %v719 = vpack.c.b16 %v669, %v667
          %v720 = vpack.c.b16 %v670, %v668
          %v721 = vpack.c.b16 %v673, %v671
          %v722 = vpack.c.b16 %v674, %v672
          %v723 = vpack.c.b16 %v677, %v675
          %v724 = vpack.c.b16 %v678, %v676
          %v725 = vpack.c.b16 %v681, %v679
          %v726 = vpack.c.b16 %v682, %v680
          %v727 = vpack.c.b16 %v685, %v683
          %v728 = vpack.c.b16 %v686, %v684
          %v729 = vpack.c.b16 %v689, %v687
          %v730 = vpack.c.b16 %v690, %v688
          %v731 = vpack.c.b16 %v693, %v691
          %v732 = vpack.c.b16 %v694, %v692
          %v733 = vpack.c.b16 %v697, %v695
          %v734 = vpack.c.b16 %v698, %v696
          %v735 = vpack.c.b16 %v701, %v699
          %v736 = vpack.c.b16 %v702, %v700
          %v737 = vpack.c.b16 %v705, %v703
          %v738 = vpack.c.b16 %v706, %v704
          %771 = vmatpush.bf16.msra.mxu0 %v721
          %772 = vmatpush.bf16.msra.mxu0 %v719
          %773 = vmatpush.bf16.msra.mxu0 %v717
          %774 = vmatpush.bf16.msra.mxu0 %v715
          %775 = vmatpush.bf16.msra.mxu0 %v713
          %776 = vmatpush.bf16.msra.mxu0 %v711
          %777 = vmatpush.bf16.msra.mxu0 %v709
          %778 = vmatpush.bf16.msra.mxu0 %v707
          %779 = vmatmul.bf16.gmra.mxu0 %v598
          %v780 = vpop.f32.mrf.mxu0
          %v781 = vadd.f32 %v607, %v780
          %v782 = vpop.f32.mrf.mxu0
          %v783 = vadd.f32 %v607, %v782
          %784 = vmatmul.bf16.gmra.mxu0 %v600
          %v785 = vpop.f32.mrf.mxu0
          %v786 = vadd.f32 %v607, %v785
          %v787 = vpop.f32.mrf.mxu0
          %v788 = vadd.f32 %v607, %v787
          %789 = vmatmul.bf16.gmra.mxu0 %v602
          %v790 = vpop.f32.mrf.mxu0
          %v791 = vadd.f32 %v607, %v790
          %v792 = vpop.f32.mrf.mxu0
          %v793 = vadd.f32 %v607, %v792
          %794 = vmatmul.bf16.gmra.mxu0 %v604
          %v795 = vpop.f32.mrf.mxu0
          %v796 = vadd.f32 %v607, %v795
          %v797 = vpop.f32.mrf.mxu0
          %v798 = vadd.f32 %v607, %v797
          %799 = vdwg.mxu0
          %800 = vmatpush.bf16.msra.mxu0 %v737
          %801 = vmatpush.bf16.msra.mxu0 %v735
          %802 = vmatpush.bf16.msra.mxu0 %v733
          %803 = vmatpush.bf16.msra.mxu0 %v731
          %804 = vmatpush.bf16.msra.mxu0 %v729
          %805 = vmatpush.bf16.msra.mxu0 %v727
          %806 = vmatpush.bf16.msra.mxu0 %v725
          %807 = vmatpush.bf16.msra.mxu0 %v723
          %808 = vmatmul.bf16.gmra.mxu0 %v599
          %v809 = vpop.f32.mrf.mxu0
          %v810 = vadd.f32 %v781, %v809
          %v811 = vpop.f32.mrf.mxu0
          %v812 = vadd.f32 %v783, %v811
          %813 = vmatmul.bf16.gmra.mxu0 %v601
          %v814 = vpop.f32.mrf.mxu0
          %v815 = vadd.f32 %v786, %v814
          %v816 = vpop.f32.mrf.mxu0
          %v817 = vadd.f32 %v788, %v816
          %818 = vmatmul.bf16.gmra.mxu0 %v603
          %v819 = vpop.f32.mrf.mxu0
          %v820 = vadd.f32 %v791, %v819
          %v821 = vpop.f32.mrf.mxu0
          %v822 = vadd.f32 %v793, %v821
          %823 = vmatmul.bf16.gmra.mxu0 %v605
          %v824 = vpop.f32.mrf.mxu0
          %v825 = vadd.f32 %v796, %v824
          %v826 = vpop.f32.mrf.mxu0
          %v827 = vadd.f32 %v798, %v826
          %828 = vdwg.mxu0
          %829 = vmatpush.bf16.msra.mxu0 %v722
          %830 = vmatpush.bf16.msra.mxu0 %v720
          %831 = vmatpush.bf16.msra.mxu0 %v718
          %832 = vmatpush.bf16.msra.mxu0 %v716
          %833 = vmatpush.bf16.msra.mxu0 %v714
          %834 = vmatpush.bf16.msra.mxu0 %v712
          %835 = vmatpush.bf16.msra.mxu0 %v710
          %836 = vmatpush.bf16.msra.mxu0 %v708
          %837 = vmatmul.bf16.gmra.mxu0 %v598
          %v838 = vpop.f32.mrf.mxu0
          %v839 = vadd.f32 %v608, %v838
          %v840 = vpop.f32.mrf.mxu0
          %v841 = vadd.f32 %v608, %v840
          %842 = vmatmul.bf16.gmra.mxu0 %v600
          %v843 = vpop.f32.mrf.mxu0
          %v844 = vadd.f32 %v608, %v843
          %v845 = vpop.f32.mrf.mxu0
          %v846 = vadd.f32 %v608, %v845
          %847 = vmatmul.bf16.gmra.mxu0 %v602
          %v848 = vpop.f32.mrf.mxu0
          %v849 = vadd.f32 %v608, %v848
          %v850 = vpop.f32.mrf.mxu0
          %v851 = vadd.f32 %v608, %v850
          %852 = vmatmul.bf16.gmra.mxu0 %v604
          %v853 = vpop.f32.mrf.mxu0
          %v854 = vadd.f32 %v608, %v853
          %v855 = vpop.f32.mrf.mxu0
          %v856 = vadd.f32 %v608, %v855
          %857 = vdwg.mxu0
          %858 = vmatpush.bf16.msra.mxu0 %v738
          %859 = vmatpush.bf16.msra.mxu0 %v736
          %860 = vmatpush.bf16.msra.mxu0 %v734
          %861 = vmatpush.bf16.msra.mxu0 %v732
          %862 = vmatpush.bf16.msra.mxu0 %v730
          %863 = vmatpush.bf16.msra.mxu0 %v728
          %864 = vmatpush.bf16.msra.mxu0 %v726
          %865 = vmatpush.bf16.msra.mxu0 %v724
          %866 = vmatmul.bf16.gmra.mxu0 %v599
          %v867 = vpop.f32.mrf.mxu0
          %v868 = vadd.f32 %v839, %v867
          %v869 = vpop.f32.mrf.mxu0
          %v870 = vadd.f32 %v841, %v869
          %871 = vmatmul.bf16.gmra.mxu0 %v601
          %v872 = vpop.f32.mrf.mxu0
          %v873 = vadd.f32 %v844, %v872
          %v874 = vpop.f32.mrf.mxu0
          %v875 = vadd.f32 %v846, %v874
          %876 = vmatmul.bf16.gmra.mxu0 %v603
          %v877 = vpop.f32.mrf.mxu0
          %v878 = vadd.f32 %v849, %v877
          %v879 = vpop.f32.mrf.mxu0
          %v880 = vadd.f32 %v851, %v879
          %881 = vmatmul.bf16.gmra.mxu0 %v605
          %v882 = vpop.f32.mrf.mxu0
          %v883 = vadd.f32 %v854, %v882
          %v884 = vpop.f32.mrf.mxu0
          %v885 = vadd.f32 %v856, %v884
          %886 = vdwg.mxu0
          %887 = vst [vmem:[#allocation2] sm:$0xff] %v810
          %888 = vst [vmem:[#allocation2 + $0x8] sm:$0xff] %v868
          %889 = vst [vmem:[#allocation2 + $0x10] sm:$0xff] %v812
          %890 = vst [vmem:[#allocation2 + $0x18] sm:$0xff] %v870
          %891 = vst [vmem:[#allocation2 + $0x20] sm:$0xff] %v815
          %892 = vst [vmem:[#allocation2 + $0x28] sm:$0xff] %v873
          %893 = vst [vmem:[#allocation2 + $0x30] sm:$0xff] %v817
          %894 = vst [vmem:[#allocation2 + $0x38] sm:$0xff] %v875
          %895 = vst [vmem:[#allocation2 + $0x40] sm:$0xff] %v820
          %896 = vst [vmem:[#allocation2 + $0x48] sm:$0xff] %v878
          %897 = vst [vmem:[#allocation2 + $0x50] sm:$0xff] %v822
          %898 = vst [vmem:[#allocation2 + $0x58] sm:$0xff] %v880
          %899 = vst [vmem:[#allocation2 + $0x60] sm:$0xff] %v825
          %900 = vst [vmem:[#allocation2 + $0x68] sm:$0xff] %v883
          %901 = vst [vmem:[#allocation2 + $0x70] sm:$0xff] %v827
          %902 = vst [vmem:[#allocation2 + $0x78] sm:$0xff] %v885
        $region44: #{bdrnn_ae_forward.1} parent=31 // pred_fallthru
          _
        %v903 = vld [vmem:[%s168 + $0x100] sm:$0xf]
        %v904 = vld [vmem:[%s168 + $0x108] sm:$0xf]
        %v905 = vld [vmem:[%s168 + $0x110] sm:$0xf]
        %v906 = vld [vmem:[%s168 + $0x118] sm:$0xf]
        %v907 = vld [vmem:[%s168 + $0x120] sm:$0xf]
        %v908 = vld [vmem:[%s168 + $0x128] sm:$0xf]
        %v909 = vld [vmem:[%s168 + $0x130] sm:$0xf]
        %v910 = vld [vmem:[%s168 + $0x138] sm:$0xf]
        %v911 = vld [vmem:[%s168 + $0x140] sm:$0xf]
        %v912 = vld [vmem:[%s168 + $0x148] sm:$0xf]
        %v913 = vld [vmem:[%s168 + $0x150] sm:$0xf]
        %v914 = vld [vmem:[%s168 + $0x158] sm:$0xf]
        %v915 = vld [vmem:[%s168 + $0x160] sm:$0xf]
        %v916 = vld [vmem:[%s168 + $0x168] sm:$0xf]
        %v917 = vld [vmem:[%s168 + $0x170] sm:$0xf]
        %v918 = vld [vmem:[%s168 + $0x178] sm:$0xf]
        %v919 = vld [vmem:[%s168 + $0x184] sm:$0xf]
        %v920 = vld [vmem:[%s168 + $0x18c] sm:$0xf]
        %v921 = vld [vmem:[%s168 + $0x194] sm:$0xf]
        %v922 = vld [vmem:[%s168 + $0x19c] sm:$0xf]
        %v923 = vld [vmem:[%s168 + $0x1a4] sm:$0xf]
        %v924 = vld [vmem:[%s168 + $0x1ac] sm:$0xf]
        %v925 = vld [vmem:[%s168 + $0x1b4] sm:$0xf]
        %v926 = vld [vmem:[%s168 + $0x1bc] sm:$0xf]
        %v927 = vld [vmem:[%s168 + $0x1c4] sm:$0xf]
        %v928 = vld [vmem:[%s168 + $0x1cc] sm:$0xf]
        %v929 = vld [vmem:[%s168 + $0x1d4] sm:$0xf]
        %v930 = vld [vmem:[%s168 + $0x1dc] sm:$0xf]
        %v931 = vld [vmem:[%s168 + $0x1e4] sm:$0xf]
        %v932 = vld [vmem:[%s168 + $0x1ec] sm:$0xf]
        %v933 = vld [vmem:[%s168 + $0x1f4] sm:$0xf]
        %v934 = vld [vmem:[%s168 + $0x1fc] sm:$0xf]
        %v935 = vld [vmem:[#allocation2] sm:$0xff]
        %v952 = vunpack.c.l.b16 %v903
        %v953 = vunpack.c.l.b16 %v904
        %v954 = vunpack.c.l.b16 %v905
        %v955 = vunpack.c.l.b16 %v906
        %v956 = vunpack.c.l.b16 %v907
        %v957 = vunpack.c.l.b16 %v908
        %v958 = vunpack.c.l.b16 %v909
        %v959 = vunpack.c.l.b16 %v910
        %v960 = vunpack.c.l.b16 %v911
        %v961 = vunpack.c.l.b16 %v912
        %v962 = vunpack.c.l.b16 %v913
        %v963 = vunpack.c.l.b16 %v914
        %v964 = vunpack.c.l.b16 %v915
        %v965 = vunpack.c.l.b16 %v916
        %v966 = vunpack.c.l.b16 %v917
        %v967 = vunpack.c.l.b16 %v918
        %v968 = vpack.c.b16 %v953, %v952
        %v969 = vpack.c.b16 %v955, %v954
        %v970 = vpack.c.b16 %v957, %v956
        %v971 = vpack.c.b16 %v959, %v958
        %v972 = vpack.c.b16 %v961, %v960
        %v973 = vpack.c.b16 %v963, %v962
        %v974 = vpack.c.b16 %v965, %v964
        %v975 = vpack.c.b16 %v967, %v966
        %984 = vmatpush.bf16.msra.mxu0 %v975
        %985 = vmatpush.bf16.msra.mxu0 %v974
        %986 = vmatpush.bf16.msra.mxu0 %v973
        %987 = vmatpush.bf16.msra.mxu0 %v972
        %988 = vmatpush.bf16.msra.mxu0 %v971
        %989 = vmatpush.bf16.msra.mxu0 %v970
        %990 = vmatpush.bf16.msra.mxu0 %v969
        %991 = vmatpush.bf16.msra.mxu0 %v968
        %992 = vmatmul.bf16.gmra.mxu0 0
        %v993 = vpop.f32.mrf.mxu0
        %v994 = vadd.f32 %v935, %v993
        %v995 = vpop.f32.mrf.mxu0
        %996 = vdwg.mxu0
        %v997 = vtanh.pop %v994
        %v998 = vld [vmem:[#allocation2 + $0x78] sm:$0xff]
        %v1015 = vunpack.c.l.b16 %v919
        %v1016 = vunpack.c.l.b16 %v920
        %v1017 = vunpack.c.l.b16 %v921
        %v1018 = vunpack.c.l.b16 %v922
        %v1019 = vunpack.c.l.b16 %v923
        %v1020 = vunpack.c.l.b16 %v924
        %v1021 = vunpack.c.l.b16 %v925
        %v1022 = vunpack.c.l.b16 %v926
        %v1023 = vunpack.c.l.b16 %v927
        %v1024 = vunpack.c.l.b16 %v928
        %v1025 = vunpack.c.l.b16 %v929
        %v1026 = vunpack.c.l.b16 %v930
        %v1027 = vunpack.c.l.b16 %v931
        %v1028 = vunpack.c.l.b16 %v932
        %v1029 = vunpack.c.l.b16 %v933
        %v1030 = vunpack.c.l.b16 %v934
        %v1031 = vpack.c.b16 %v1016, %v1015
        %v1032 = vpack.c.b16 %v1018, %v1017
        %v1033 = vpack.c.b16 %v1020, %v1019
        %v1034 = vpack.c.b16 %v1022, %v1021
        %v1035 = vpack.c.b16 %v1024, %v1023
        %v1036 = vpack.c.b16 %v1026, %v1025
        %v1037 = vpack.c.b16 %v1028, %v1027
        %v1038 = vpack.c.b16 %v1030, %v1029
        %1047 = vmatpush.bf16.msra.mxu0 %v1038
        %1048 = vmatpush.bf16.msra.mxu0 %v1037
        %1049 = vmatpush.bf16.msra.mxu0 %v1036
        %1050 = vmatpush.bf16.msra.mxu0 %v1035
        %1051 = vmatpush.bf16.msra.mxu0 %v1034
        %1052 = vmatpush.bf16.msra.mxu0 %v1033
        %1053 = vmatpush.bf16.msra.mxu0 %v1032
        %1054 = vmatpush.bf16.msra.mxu0 %v1031
        %1055 = vmatmul.bf16.gmra.mxu0 0
        %v1056 = vpop.f32.mrf.mxu0
        %v1057 = vadd.f32 %v998, %v1056
        %v1058 = vpop.f32.mrf.mxu0
        %1059 = vdwg.mxu0
        %v1060 = vtanh.pop %v1057
        %1061 = vst [vmem:[%s3] sm:$0xff] %v997
        %1062 = vst [vmem:[%s3 + $0x78] sm:$0xff] %v1060
        %v1063 = vpack.c.bf16 %v997, %v997
        %v1064 = vld [vmem:[#allocation2 + $0x10] sm:$0xff]
        %1065 = vmatpush.bf16.msra.mxu0 %v975
        %1066 = vmatpush.bf16.msra.mxu0 %v974
        %1067 = vmatpush.bf16.msra.mxu0 %v973
        %1068 = vmatpush.bf16.msra.mxu0 %v972
        %1069 = vmatpush.bf16.msra.mxu0 %v971
        %1070 = vmatpush.bf16.msra.mxu0 %v970
        %1071 = vmatpush.bf16.msra.mxu0 %v969
        %1072 = vmatpush.bf16.msra.mxu0 %v968
        %1073 = vmatmul.bf16.gmra.mxu0 %v1063
        %v1074 = vpop.f32.mrf.mxu0
        %v1075 = vadd.f32 %v1064, %v1074
        %v1076 = vpop.f32.mrf.mxu0
        %1077 = vdwg.mxu0
        %v1078 = vtanh.pop %v1075
        %v1079 = vpack.c.bf16 %v1060, %v1060
        %v1080 = vld [vmem:[#allocation2 + $0x68] sm:$0xff]
        %1081 = vmatpush.bf16.msra.mxu0 %v1038
        %1082 = vmatpush.bf16.msra.mxu0 %v1037
        %1083 = vmatpush.bf16.msra.mxu0 %v1036
        %1084 = vmatpush.bf16.msra.mxu0 %v1035
        %1085 = vmatpush.bf16.msra.mxu0 %v1034
        %1086 = vmatpush.bf16.msra.mxu0 %v1033
        %1087 = vmatpush.bf16.msra.mxu0 %v1032
        %1088 = vmatpush.bf16.msra.mxu0 %v1031
        %1089 = vmatmul.bf16.gmra.mxu0 %v1079
        %v1090 = vpop.f32.mrf.mxu0
        %v1091 = vadd.f32 %v1080, %v1090
        %v1092 = vpop.f32.mrf.mxu0
        %1093 = vdwg.mxu0
        %v1094 = vtanh.pop %v1091
        %1095 = vst [vmem:[%s3 + $0x10] sm:$0xff] %v1078
        %1096 = vst [vmem:[%s3 + $0x68] sm:$0xff] %v1094
        %v1097 = vpack.c.bf16 %v1078, %v1078
        %v1098 = vld [vmem:[#allocation2 + $0x20] sm:$0xff]
        %1099 = vmatpush.bf16.msra.mxu0 %v975
        %1100 = vmatpush.bf16.msra.mxu0 %v974
        %1101 = vmatpush.bf16.msra.mxu0 %v973
        %1102 = vmatpush.bf16.msra.mxu0 %v972
        %1103 = vmatpush.bf16.msra.mxu0 %v971
        %1104 = vmatpush.bf16.msra.mxu0 %v970
        %1105 = vmatpush.bf16.msra.mxu0 %v969
        %1106 = vmatpush.bf16.msra.mxu0 %v968
        %1107 = vmatmul.bf16.gmra.mxu0 %v1097
        %v1108 = vpop.f32.mrf.mxu0
        %v1109 = vadd.f32 %v1098, %v1108
        %v1110 = vpop.f32.mrf.mxu0
        %1111 = vdwg.mxu0
        %v1112 = vtanh.pop %v1109
        %v1113 = vpack.c.bf16 %v1094, %v1094
        %v1114 = vld [vmem:[#allocation2 + $0x58] sm:$0xff]
        %1115 = vmatpush.bf16.msra.mxu0 %v1038
        %1116 = vmatpush.bf16.msra.mxu0 %v1037
        %1117 = vmatpush.bf16.msra.mxu0 %v1036
        %1118 = vmatpush.bf16.msra.mxu0 %v1035
        %1119 = vmatpush.bf16.msra.mxu0 %v1034
        %1120 = vmatpush.bf16.msra.mxu0 %v1033
        %1121 = vmatpush.bf16.msra.mxu0 %v1032
        %1122 = vmatpush.bf16.msra.mxu0 %v1031
        %1123 = vmatmul.bf16.gmra.mxu0 %v1113
        %v1124 = vpop.f32.mrf.mxu0
        %v1125 = vadd.f32 %v1114, %v1124
        %v1126 = vpop.f32.mrf.mxu0
        %1127 = vdwg.mxu0
        %v1128 = vtanh.pop %v1125
        %1129 = vst [vmem:[%s3 + $0x20] sm:$0xff] %v1112
        %1130 = vst [vmem:[%s3 + $0x58] sm:$0xff] %v1128
        %v1131 = vpack.c.bf16 %v1112, %v1112
        %v1132 = vld [vmem:[#allocation2 + $0x30] sm:$0xff]
        %1133 = vmatpush.bf16.msra.mxu0 %v975
        %1134 = vmatpush.bf16.msra.mxu0 %v974
        %1135 = vmatpush.bf16.msra.mxu0 %v973
        %1136 = vmatpush.bf16.msra.mxu0 %v972
        %1137 = vmatpush.bf16.msra.mxu0 %v971
        %1138 = vmatpush.bf16.msra.mxu0 %v970
        %1139 = vmatpush.bf16.msra.mxu0 %v969
        %1140 = vmatpush.bf16.msra.mxu0 %v968
        %1141 = vmatmul.bf16.gmra.mxu0 %v1131
        %v1142 = vpop.f32.mrf.mxu0
        %v1143 = vadd.f32 %v1132, %v1142
        %v1144 = vpop.f32.mrf.mxu0
        %1145 = vdwg.mxu0
        %v1146 = vtanh.pop %v1143
        %v1147 = vpack.c.bf16 %v1128, %v1128
        %v1148 = vld [vmem:[#allocation2 + $0x48] sm:$0xff]
        %1149 = vmatpush.bf16.msra.mxu0 %v1038
        %1150 = vmatpush.bf16.msra.mxu0 %v1037
        %1151 = vmatpush.bf16.msra.mxu0 %v1036
        %1152 = vmatpush.bf16.msra.mxu0 %v1035
        %1153 = vmatpush.bf16.msra.mxu0 %v1034
        %1154 = vmatpush.bf16.msra.mxu0 %v1033
        %1155 = vmatpush.bf16.msra.mxu0 %v1032
        %1156 = vmatpush.bf16.msra.mxu0 %v1031
        %1157 = vmatmul.bf16.gmra.mxu0 %v1147
        %v1158 = vpop.f32.mrf.mxu0
        %v1159 = vadd.f32 %v1148, %v1158
        %v1160 = vpop.f32.mrf.mxu0
        %1161 = vdwg.mxu0
        %v1162 = vtanh.pop %v1159
        %1163 = vst [vmem:[%s3 + $0x30] sm:$0xff] %v1146
        %1164 = vst [vmem:[%s3 + $0x48] sm:$0xff] %v1162
        %v1165 = vpack.c.bf16 %v1146, %v1146
        %v1166 = vld [vmem:[#allocation2 + $0x40] sm:$0xff]
        %1167 = vmatpush.bf16.msra.mxu0 %v975
        %1168 = vmatpush.bf16.msra.mxu0 %v974
        %1169 = vmatpush.bf16.msra.mxu0 %v973
        %1170 = vmatpush.bf16.msra.mxu0 %v972
        %1171 = vmatpush.bf16.msra.mxu0 %v971
        %1172 = vmatpush.bf16.msra.mxu0 %v970
        %1173 = vmatpush.bf16.msra.mxu0 %v969
        %1174 = vmatpush.bf16.msra.mxu0 %v968
        %1175 = vmatmul.bf16.gmra.mxu0 %v1165
        %v1176 = vpop.f32.mrf.mxu0
        %v1177 = vadd.f32 %v1166, %v1176
        %v1178 = vpop.f32.mrf.mxu0
        %1179 = vdwg.mxu0
        %v1180 = vtanh.pop %v1177
        %v1181 = vpack.c.bf16 %v1162, %v1162
        %v1182 = vld [vmem:[#allocation2 + $0x38] sm:$0xff]
        %1183 = vmatpush.bf16.msra.mxu0 %v1038
        %1184 = vmatpush.bf16.msra.mxu0 %v1037
        %1185 = vmatpush.bf16.msra.mxu0 %v1036
        %1186 = vmatpush.bf16.msra.mxu0 %v1035
        %1187 = vmatpush.bf16.msra.mxu0 %v1034
        %1188 = vmatpush.bf16.msra.mxu0 %v1033
        %1189 = vmatpush.bf16.msra.mxu0 %v1032
        %1190 = vmatpush.bf16.msra.mxu0 %v1031
        %1191 = vmatmul.bf16.gmra.mxu0 %v1181
        %v1192 = vpop.f32.mrf.mxu0
        %v1193 = vadd.f32 %v1182, %v1192
        %v1194 = vpop.f32.mrf.mxu0
        %1195 = vdwg.mxu0
        %v1196 = vtanh.pop %v1193
        %1197 = vst [vmem:[%s3 + $0x40] sm:$0xff] %v1180
        %1198 = vst [vmem:[%s3 + $0x38] sm:$0xff] %v1196
        %v1199 = vpack.c.bf16 %v1180, %v1180
        %v1200 = vld [vmem:[#allocation2 + $0x50] sm:$0xff]
        %1201 = vmatpush.bf16.msra.mxu0 %v975
        %1202 = vmatpush.bf16.msra.mxu0 %v974
        %1203 = vmatpush.bf16.msra.mxu0 %v973
        %1204 = vmatpush.bf16.msra.mxu0 %v972
        %1205 = vmatpush.bf16.msra.mxu0 %v971
        %1206 = vmatpush.bf16.msra.mxu0 %v970
        %1207 = vmatpush.bf16.msra.mxu0 %v969
        %1208 = vmatpush.bf16.msra.mxu0 %v968
        %1209 = vmatmul.bf16.gmra.mxu0 %v1199
        %v1210 = vpop.f32.mrf.mxu0
        %v1211 = vadd.f32 %v1200, %v1210
        %v1212 = vpop.f32.mrf.mxu0
        %1213 = vdwg.mxu0
        %v1214 = vtanh.pop %v1211
        %v1215 = vpack.c.bf16 %v1196, %v1196
        %v1216 = vld [vmem:[#allocation2 + $0x28] sm:$0xff]
        %1217 = vmatpush.bf16.msra.mxu0 %v1038
        %1218 = vmatpush.bf16.msra.mxu0 %v1037
        %1219 = vmatpush.bf16.msra.mxu0 %v1036
        %1220 = vmatpush.bf16.msra.mxu0 %v1035
        %1221 = vmatpush.bf16.msra.mxu0 %v1034
        %1222 = vmatpush.bf16.msra.mxu0 %v1033
        %1223 = vmatpush.bf16.msra.mxu0 %v1032
        %1224 = vmatpush.bf16.msra.mxu0 %v1031
        %1225 = vmatmul.bf16.gmra.mxu0 %v1215
        %v1226 = vpop.f32.mrf.mxu0
        %v1227 = vadd.f32 %v1216, %v1226
        %v1228 = vpop.f32.mrf.mxu0
        %1229 = vdwg.mxu0
        %v1230 = vtanh.pop %v1227
        %1231 = vst [vmem:[%s3 + $0x50] sm:$0xff] %v1214
        %1232 = vst [vmem:[%s3 + $0x28] sm:$0xff] %v1230
        %v1233 = vpack.c.bf16 %v1214, %v1214
        %v1234 = vld [vmem:[#allocation2 + $0x60] sm:$0xff]
        %1235 = vmatpush.bf16.msra.mxu0 %v975
        %1236 = vmatpush.bf16.msra.mxu0 %v974
        %1237 = vmatpush.bf16.msra.mxu0 %v973
        %1238 = vmatpush.bf16.msra.mxu0 %v972
        %1239 = vmatpush.bf16.msra.mxu0 %v971
        %1240 = vmatpush.bf16.msra.mxu0 %v970
        %1241 = vmatpush.bf16.msra.mxu0 %v969
        %1242 = vmatpush.bf16.msra.mxu0 %v968
        %1243 = vmatmul.bf16.gmra.mxu0 %v1233
        %v1244 = vpop.f32.mrf.mxu0
        %v1245 = vadd.f32 %v1234, %v1244
        %v1246 = vpop.f32.mrf.mxu0
        %1247 = vdwg.mxu0
        %v1248 = vtanh.pop %v1245
        %v1249 = vpack.c.bf16 %v1230, %v1230
        %v1250 = vld [vmem:[#allocation2 + $0x18] sm:$0xff]
        %1251 = vmatpush.bf16.msra.mxu0 %v1038
        %1252 = vmatpush.bf16.msra.mxu0 %v1037
        %1253 = vmatpush.bf16.msra.mxu0 %v1036
        %1254 = vmatpush.bf16.msra.mxu0 %v1035
        %1255 = vmatpush.bf16.msra.mxu0 %v1034
        %1256 = vmatpush.bf16.msra.mxu0 %v1033
        %1257 = vmatpush.bf16.msra.mxu0 %v1032
        %1258 = vmatpush.bf16.msra.mxu0 %v1031
        %1259 = vmatmul.bf16.gmra.mxu0 %v1249
        %v1260 = vpop.f32.mrf.mxu0
        %v1261 = vadd.f32 %v1250, %v1260
        %v1262 = vpop.f32.mrf.mxu0
        %1263 = vdwg.mxu0
        %v1264 = vtanh.pop %v1261
        %1265 = vst [vmem:[%s3 + $0x60] sm:$0xff] %v1248
        %1266 = vst [vmem:[%s3 + $0x18] sm:$0xff] %v1264
        %v1267 = vpack.c.bf16 %v1248, %v1248
        %v1268 = vld [vmem:[#allocation2 + $0x70] sm:$0xff]
        %1269 = vmatpush.bf16.msra.mxu0 %v975
        %1270 = vmatpush.bf16.msra.mxu0 %v974
        %1271 = vmatpush.bf16.msra.mxu0 %v973
        %1272 = vmatpush.bf16.msra.mxu0 %v972
        %1273 = vmatpush.bf16.msra.mxu0 %v971
        %1274 = vmatpush.bf16.msra.mxu0 %v970
        %1275 = vmatpush.bf16.msra.mxu0 %v969
        %1276 = vmatpush.bf16.msra.mxu0 %v968
        %1277 = vmatmul.bf16.gmra.mxu0 %v1267
        %v1278 = vpop.f32.mrf.mxu0
        %v1279 = vadd.f32 %v1268, %v1278
        %v1280 = vpop.f32.mrf.mxu0
        %1281 = vdwg.mxu0
        %v1282 = vtanh.pop %v1279
        %v1283 = vpack.c.bf16 %v1264, %v1264
        %v1284 = vld [vmem:[#allocation2 + $0x8] sm:$0xff]
        %1285 = vmatpush.bf16.msra.mxu0 %v1038
        %1286 = vmatpush.bf16.msra.mxu0 %v1037
        %1287 = vmatpush.bf16.msra.mxu0 %v1036
        %1288 = vmatpush.bf16.msra.mxu0 %v1035
        %1289 = vmatpush.bf16.msra.mxu0 %v1034
        %1290 = vmatpush.bf16.msra.mxu0 %v1033
        %1291 = vmatpush.bf16.msra.mxu0 %v1032
        %1292 = vmatpush.bf16.msra.mxu0 %v1031
        %1293 = vmatmul.bf16.gmra.mxu0 %v1283
        %v1294 = vpop.f32.mrf.mxu0
        %v1295 = vadd.f32 %v1284, %v1294
        %v1296 = vpop.f32.mrf.mxu0
        %1297 = vdwg.mxu0
        %v1298 = vtanh.pop %v1295
        %1299 = vst [vmem:[%s3 + $0x70] sm:$0xff] %v1282
        %1300 = vst [vmem:[%s3 + $0x8] sm:$0xff] %v1298
        // Predicated region
        $region45: #{bdrnn_ae_forward.1} parent=31 // pred_check
          %p1301 = pneg %p103
        $region46: #{bdrnn_ae_forward.1} parent=31 // pred_check_branch
          %1303 = sbr.rel (%p1301) target = $region48
        $region47: #{bdrnn_ae_forward.1} parent=31 // pred_region
          _
        $region48: #{bdrnn_ae_forward.1} parent=31 // pred_fallthru
          _
        // Predicated region
        $region49: #{bdrnn_ae_forward.1} parent=31 // pred_check
          %p1304 = pneg %p103
        $region50: #{bdrnn_ae_forward.1} parent=31 // pred_check_branch
          %1306 = sbr.rel (%p1304) target = $region52
        $region51: #{bdrnn_ae_forward.1} parent=31 // pred_region
          _
        $region52: #{bdrnn_ae_forward.1} parent=31 // pred_fallthru
          _
      $region32: #{bdrnn_ae_forward.1} parent=5 // pred_fallthru
        _
      %p1307 = scmp.le.s32.totalorder 2, %s12
      // Predicated region
      $region53: #{bdrnn_ae_forward.1} parent=5 // pred_check
        %p1308 = pneg %p1307
      $region54: #{bdrnn_ae_forward.1} parent=5 // pred_check_branch
        %1310 = sbr.rel (%p1308) target = $region56
      $region55: #{bdrnn_ae_forward.1} parent=5 // pred_region
        %s1311 = ssub.s32 %s12, 2
      $region56: #{bdrnn_ae_forward.1} parent=5 // pred_fallthru
        _
    $region6: #{bdrnn_ae_forward.1} parent=1 // loop_footer
      %s16 = sadd.s32 1, %s12
    $region7: #{bdrnn_ae_forward.1} parent=1 // loop_footer_branch
      %11 = sbr.rel target = $region3
    $region8: #{bdrnn_ae_forward.1} parent=1 // loop_exit
      _
    %1312 = vsyncpa [#allocation4], 1
    %s1313 = scalar_lea.sflag [#allocation4], 1
    %1314 = vsyncpa %s1313, 1

</llo_original>
